<compile_context>
chip_gen: v7x
topology: tpu7x:2x2x1
jax: 0.10.0
libtpu: 0.0.40
codegen_flags: <defaults>
</compile_context>

<pallas_src>
import jax
import jax.numpy as jnp
from jax.experimental import pallas as pl
from jax.experimental.pallas import tpu as pltpu


# ----------------------------------------------------------------------------
# Fused Pallas kernel
# ----------------------------------------------------------------------------
def fused_gin_kernel(
    a_ref, x_ref, mask_ref,
    c1w1_ref, c1b1_ref, c1w2_ref, c1b2_ref,
    c2w1_ref, c2b1_ref, c2w2_ref, c2b2_ref,
    c3w1_ref, c3b1_ref, c3w2_ref, c3b2_ref,
    l1wa_ref, l1wb_ref, l1wc_ref, l1b_ref,
    l2w_ref, l2b_ref,
    out_ref,
):
    a = a_ref[...]          # (Np, Np) dense A + (1+eps)I (zero rows for padded nodes)
    mask = mask_ref[...]    # (8, Np)  replicated mask: 1.0 for real nodes, 0.0 for pad

    def gin_conv(h, w1, b1, w2, b2):
        # agg_i = (1+eps)*h_i + sum_{j in N(i)} h_j  ==  A_hat @ h
        agg = jnp.dot(a, h, preferred_element_type=jnp.float32)
        z = jnp.dot(agg, w1, preferred_element_type=jnp.float32) + b1
        z = jnp.maximum(z, 0.0)
        z = jnp.dot(z, w2, preferred_element_type=jnp.float32) + b2
        return jnp.maximum(z, 0.0)

    h1 = gin_conv(x_ref[...], c1w1_ref[...], c1b1_ref[...], c1w2_ref[...], c1b2_ref[...])
    h2 = gin_conv(h1, c2w1_ref[...], c2b1_ref[...], c2w2_ref[...], c2b2_ref[...])
    h3 = gin_conv(h2, c3w1_ref[...], c3b1_ref[...], c3w2_ref[...], c3b2_ref[...])

    # global_add_pool over real nodes only, on the MXU: (8, Np) @ (Np, Dp).
    # All 8 rows are identical; only row 0 is consumed by the caller.
    p1 = jnp.dot(mask, h1, preferred_element_type=jnp.float32)
    p2 = jnp.dot(mask, h2, preferred_element_type=jnp.float32)
    p3 = jnp.dot(mask, h3, preferred_element_type=jnp.float32)

    # lin1 over the virtual concat [p1 | p2 | p3] via pre-split weight blocks
    # (no in-kernel cross-lane concatenate).
    h = (jnp.dot(p1, l1wa_ref[...], preferred_element_type=jnp.float32)
         + jnp.dot(p2, l1wb_ref[...], preferred_element_type=jnp.float32)
         + jnp.dot(p3, l1wc_ref[...], preferred_element_type=jnp.float32)
         + l1b_ref[...])
    h = jnp.maximum(h, 0.0)
    # F.dropout(p=0.5) in eval mode == identity.
    out = jnp.dot(h, l2w_ref[...], preferred_element_type=jnp.float32) + l2b_ref[...]
    out_ref[...] = out.astype(out_ref.dtype)


# ----------------------------------------------------------------------------
# Wrapper (padding, pallas_call)
# ----------------------------------------------------------------------------
def _round_up(v, m):
    return ((v + m - 1) // m) * m


def _pad2d(a, rows, cols):
    return jnp.pad(a, ((0, rows - a.shape[0]), (0, cols - a.shape[1])))


def _vmem_spec():
    return pl.BlockSpec(memory_space=pltpu.MemorySpace.VMEM)


def gin_forward_impl(x, a_hat, mask8, params):
    n_pad = a_hat.shape[0]
    f = x.shape[1]

    c1w1, c1b1, c1w2, c1b2 = params["conv1"]
    c2w1, c2b1, c2w2, c2b2 = params["conv2"]
    c3w1, c3b1, c3w2, c3b2 = params["conv3"]
    l1w, l1b, l2w, l2b = params["head"]

    dim_h = c1w1.shape[1]
    num_classes = l2w.shape[1]

    # Lane-dense padded sizes (multiples of 128 on the last axis).
    f_pad = _round_up(f, 128)
    d_pad = _round_up(dim_h, 128)
    h1_pad = _round_up(3 * dim_h, 128)
    c_pad = _round_up(num_classes, 128)

    x_p = _pad2d(x, n_pad, f_pad)

    def pad_conv(w1, b1, w2, b2, fan_in_pad):
        return (_pad2d(w1, fan_in_pad, d_pad), _pad2d(b1, 1, d_pad),
                _pad2d(w2, d_pad, d_pad), _pad2d(b2, 1, d_pad))

    c1 = pad_conv(c1w1, c1b1, c1w2, c1b2, f_pad)
    c2 = pad_conv(c2w1, c2b1, c2w2, c2b2, d_pad)
    c3 = pad_conv(c3w1, c3b1, c3w2, c3b2, d_pad)

    # Split lin1 weights by source block so the kernel never concatenates.
    l1wa = _pad2d(l1w[0 * dim_h:1 * dim_h], d_pad, h1_pad)
    l1wb = _pad2d(l1w[1 * dim_h:2 * dim_h], d_pad, h1_pad)
    l1wc = _pad2d(l1w[2 * dim_h:3 * dim_h], d_pad, h1_pad)
    l1b_p = _pad2d(l1b, 1, h1_pad)
    l2w_p = _pad2d(l2w, h1_pad, c_pad)
    l2b_p = _pad2d(l2b, 1, c_pad)

    args = (a_hat, x_p, mask8,
            *c1, *c2, *c3,
            l1wa, l1wb, l1wc, l1b_p, l2w_p, l2b_p)

    # Advisory cost estimate (padded dims, all static Python ints).
    flops = (
        2 * n_pad * n_pad * f_pad + 2 * n_pad * f_pad * d_pad + 2 * n_pad * d_pad * d_pad  # conv1
        + 2 * (2 * n_pad * n_pad * d_pad + 4 * n_pad * d_pad * d_pad)                      # conv2+3
        + 3 * 2 * 8 * n_pad * d_pad                                                        # pooling
        + 3 * 2 * 8 * d_pad * h1_pad                                                       # lin1
        + 2 * 8 * h1_pad * c_pad                                                           # lin2
    )
    bytes_accessed = sum(int(a.size) * 4 for a in args) + 8 * c_pad * 4

    out_p = pl.pallas_call(
        fused_gin_kernel,
        out_shape=jax.ShapeDtypeStruct((8, c_pad), jnp.float32),
        in_specs=[_vmem_spec()] * len(args),
        out_specs=_vmem_spec(),
        cost_estimate=pl.CostEstimate(
            flops=flops, transcendentals=0, bytes_accessed=bytes_accessed),
        compiler_params=pltpu.CompilerParams(vmem_limit_bytes=32 * 1024 * 1024),
    )(*args)

    # Row 0 is the (single-graph) pooled prediction; drop lane padding.
    return out_p[0:1, :num_classes]


gin_forward = jax.jit(gin_forward_impl)


# ----------------------------------------------------------------------------
# Parameter / input construction (deterministic, synthetic)
# ----------------------------------------------------------------------------
def make_linear(key, fan_in, fan_out):
    # Deterministic PyTorch-Linear-style init (kaiming-uniform-ish bound).
    kw, kb = jax.random.split(key)
    bound = 1.0 / jnp.sqrt(fan_in)
    w = jax.random.uniform(kw, (fan_in, fan_out), jnp.float32, -bound, bound)
    b = jax.random.uniform(kb, (1, fan_out), jnp.float32, -bound, bound)
    return w, b


def make_params(key, num_node_features, dim_h, num_classes):
    keys = jax.random.split(key, 8)
    c1_w1, c1_b1 = make_linear(keys[0], num_node_features, dim_h)
    c1_w2, c1_b2 = make_linear(keys[1], dim_h, dim_h)
    c2_w1, c2_b1 = make_linear(keys[2], dim_h, dim_h)
    c2_w2, c2_b2 = make_linear(keys[3], dim_h, dim_h)
    c3_w1, c3_b1 = make_linear(keys[4], dim_h, dim_h)
    c3_w2, c3_b2 = make_linear(keys[5], dim_h, dim_h)
    l1_w, l1_b = make_linear(keys[6], dim_h * 3, dim_h * 3)
    l2_w, l2_b = make_linear(keys[7], dim_h * 3, num_classes)
    return {
        "conv1": (c1_w1, c1_b1, c1_w2, c1_b2),
        "conv2": (c2_w1, c2_b1, c2_w2, c2_b2),
        "conv3": (c3_w1, c3_b1, c3_w2, c3_b2),
        "head": (l1_w, l1_b, l2_w, l2_b),
    }


def build_a_hat(edge_index, num_nodes, n_pad, eps=0.0):
    # Dense GIN aggregation matrix at padded size:
    # A_hat[i, j] = #edges j->i, plus (1+eps) on the diagonal of REAL nodes only.
    src, dst = edge_index[0], edge_index[1]
    a = jnp.zeros((n_pad, n_pad), jnp.float32)
    a = a.at[dst, src].add(1.0)
    diag = (jnp.arange(n_pad) < num_nodes).astype(jnp.float32)
    return a + (1.0 + eps) * jnp.diag(diag)


# ----------------------------------------------------------------------------
# Main
# ----------------------------------------------------------------------------
if __name__ == "__main__":
    key = jax.random.PRNGKey(0)
    k_x, k_e, k_p = jax.random.split(key, 3)

    num_nodes = 16
    num_node_features = 8
    dim_h = 32
    num_classes = 4
    num_edges = 32

    x = jax.random.normal(k_x, (num_nodes, num_node_features), jnp.float32)
    edge_index = jax.random.randint(k_e, (2, num_edges), 0, num_nodes, jnp.int32)

    n_pad = _round_up(num_nodes, 128)
    a_hat = build_a_hat(edge_index, num_nodes, n_pad)
    node_mask = (jnp.arange(n_pad) < num_nodes).astype(jnp.float32)[None, :]
    mask8 = jnp.broadcast_to(node_mask, (8, n_pad))   # full-sublane pooling mask
    params = make_params(k_p, num_node_features, dim_h, num_classes)

    out = gin_forward(x, a_hat, mask8, params)
    jax.block_until_ready(out)
    assert out.shape == (1, num_classes), out.shape
    print("KERNEL_OK")
</pallas_src>

<mosaic_0001>
module attributes {stable_mosaic.version = 11 : i64} {
  func.func @fused_gin_kernel(%arg0: memref<128x128xf32, #tpu.memory_space<vmem>>, %arg1: memref<128x128xf32, #tpu.memory_space<vmem>>, %arg2: memref<8x128xf32, #tpu.memory_space<vmem>>, %arg3: memref<128x128xf32, #tpu.memory_space<vmem>>, %arg4: memref<1x128xf32, #tpu.memory_space<vmem>>, %arg5: memref<128x128xf32, #tpu.memory_space<vmem>>, %arg6: memref<1x128xf32, #tpu.memory_space<vmem>>, %arg7: memref<128x128xf32, #tpu.memory_space<vmem>>, %arg8: memref<1x128xf32, #tpu.memory_space<vmem>>, %arg9: memref<128x128xf32, #tpu.memory_space<vmem>>, %arg10: memref<1x128xf32, #tpu.memory_space<vmem>>, %arg11: memref<128x128xf32, #tpu.memory_space<vmem>>, %arg12: memref<1x128xf32, #tpu.memory_space<vmem>>, %arg13: memref<128x128xf32, #tpu.memory_space<vmem>>, %arg14: memref<1x128xf32, #tpu.memory_space<vmem>>, %arg15: memref<128x128xf32, #tpu.memory_space<vmem>>, %arg16: memref<128x128xf32, #tpu.memory_space<vmem>>, %arg17: memref<128x128xf32, #tpu.memory_space<vmem>>, %arg18: memref<1x128xf32, #tpu.memory_space<vmem>>, %arg19: memref<128x128xf32, #tpu.memory_space<vmem>>, %arg20: memref<1x128xf32, #tpu.memory_space<vmem>>, %arg21: memref<8x128xf32, #tpu.memory_space<vmem>>) attributes {dimension_semantics = [], scalar_prefetch = 0 : i64, scratch_operands = 0 : i64, tpu.core_type = #tpu.core_type<tc>} {
    %c0 = arith.constant 0 : index
    %c0_0 = arith.constant 0 : index
    %0 = vector.load %arg0[%c0, %c0_0] : memref<128x128xf32, #tpu.memory_space<vmem>>, vector<128x128xf32>
    %c0_1 = arith.constant 0 : index
    %c0_2 = arith.constant 0 : index
    %1 = vector.load %arg2[%c0_1, %c0_2] : memref<8x128xf32, #tpu.memory_space<vmem>>, vector<8x128xf32>
    %c0_3 = arith.constant 0 : index
    %c0_4 = arith.constant 0 : index
    %2 = vector.load %arg1[%c0_3, %c0_4] : memref<128x128xf32, #tpu.memory_space<vmem>>, vector<128x128xf32>
    %c0_5 = arith.constant 0 : index
    %c0_6 = arith.constant 0 : index
    %3 = vector.load %arg3[%c0_5, %c0_6] : memref<128x128xf32, #tpu.memory_space<vmem>>, vector<128x128xf32>
    %c0_7 = arith.constant 0 : index
    %c0_8 = arith.constant 0 : index
    %4 = vector.load %arg4[%c0_7, %c0_8] : memref<1x128xf32, #tpu.memory_space<vmem>>, vector<1x128xf32>
    %c0_9 = arith.constant 0 : index
    %c0_10 = arith.constant 0 : index
    %5 = vector.load %arg5[%c0_9, %c0_10] : memref<128x128xf32, #tpu.memory_space<vmem>>, vector<128x128xf32>
    %c0_11 = arith.constant 0 : index
    %c0_12 = arith.constant 0 : index
    %6 = vector.load %arg6[%c0_11, %c0_12] : memref<1x128xf32, #tpu.memory_space<vmem>>, vector<1x128xf32>
    %cst = arith.constant dense<0.000000e+00> : vector<128x128xf32>
    %7 = tpu.matmul %0, %2, %cst {dimension_numbers = #tpu.dot_dimension_numbers<[1], [0], [0], [1], [0, 0, 1, 1], [], []>} : vector<128x128xf32>, vector<128x128xf32>, vector<128x128xf32> -> vector<128x128xf32>
    %cst_13 = arith.constant dense<0.000000e+00> : vector<128x128xf32>
    %8 = tpu.matmul %7, %3, %cst_13 {dimension_numbers = #tpu.dot_dimension_numbers<[1], [0], [0], [1], [0, 0, 1, 1], [], []>} : vector<128x128xf32>, vector<128x128xf32>, vector<128x128xf32> -> vector<128x128xf32>
    %9 = vector.broadcast %4 : vector<1x128xf32> to vector<128x128xf32>
    %10 = arith.addf %8, %9 : vector<128x128xf32>
    %cst_14 = arith.constant 0.000000e+00 : f32
    %11 = vector.broadcast %cst_14 : f32 to vector<128x128xf32>
    %12 = arith.maximumf %10, %11 : vector<128x128xf32>
    %cst_15 = arith.constant dense<0.000000e+00> : vector<128x128xf32>
    %13 = tpu.matmul %12, %5, %cst_15 {dimension_numbers = #tpu.dot_dimension_numbers<[1], [0], [0], [1], [0, 0, 1, 1], [], []>} : vector<128x128xf32>, vector<128x128xf32>, vector<128x128xf32> -> vector<128x128xf32>
    %14 = vector.broadcast %6 : vector<1x128xf32> to vector<128x128xf32>
    %15 = arith.addf %13, %14 : vector<128x128xf32>
    %cst_16 = arith.constant 0.000000e+00 : f32
    %16 = vector.broadcast %cst_16 : f32 to vector<128x128xf32>
    %17 = arith.maximumf %15, %16 : vector<128x128xf32>
    %c0_17 = arith.constant 0 : index
    %c0_18 = arith.constant 0 : index
    %18 = vector.load %arg7[%c0_17, %c0_18] : memref<128x128xf32, #tpu.memory_space<vmem>>, vector<128x128xf32>
    %c0_19 = arith.constant 0 : index
    %c0_20 = arith.constant 0 : index
    %19 = vector.load %arg8[%c0_19, %c0_20] : memref<1x128xf32, #tpu.memory_space<vmem>>, vector<1x128xf32>
    %c0_21 = arith.constant 0 : index
    %c0_22 = arith.constant 0 : index
    %20 = vector.load %arg9[%c0_21, %c0_22] : memref<128x128xf32, #tpu.memory_space<vmem>>, vector<128x128xf32>
    %c0_23 = arith.constant 0 : index
    %c0_24 = arith.constant 0 : index
    %21 = vector.load %arg10[%c0_23, %c0_24] : memref<1x128xf32, #tpu.memory_space<vmem>>, vector<1x128xf32>
    %cst_25 = arith.constant dense<0.000000e+00> : vector<128x128xf32>
    %22 = tpu.matmul %0, %17, %cst_25 {dimension_numbers = #tpu.dot_dimension_numbers<[1], [0], [0], [1], [0, 0, 1, 1], [], []>} : vector<128x128xf32>, vector<128x128xf32>, vector<128x128xf32> -> vector<128x128xf32>
    %cst_26 = arith.constant dense<0.000000e+00> : vector<128x128xf32>
    %23 = tpu.matmul %22, %18, %cst_26 {dimension_numbers = #tpu.dot_dimension_numbers<[1], [0], [0], [1], [0, 0, 1, 1], [], []>} : vector<128x128xf32>, vector<128x128xf32>, vector<128x128xf32> -> vector<128x128xf32>
    %24 = vector.broadcast %19 : vector<1x128xf32> to vector<128x128xf32>
    %25 = arith.addf %23, %24 : vector<128x128xf32>
    %cst_27 = arith.constant 0.000000e+00 : f32
    %26 = vector.broadcast %cst_27 : f32 to vector<128x128xf32>
    %27 = arith.maximumf %25, %26 : vector<128x128xf32>
    %cst_28 = arith.constant dense<0.000000e+00> : vector<128x128xf32>
    %28 = tpu.matmul %27, %20, %cst_28 {dimension_numbers = #tpu.dot_dimension_numbers<[1], [0], [0], [1], [0, 0, 1, 1], [], []>} : vector<128x128xf32>, vector<128x128xf32>, vector<128x128xf32> -> vector<128x128xf32>
    %29 = vector.broadcast %21 : vector<1x128xf32> to vector<128x128xf32>
    %30 = arith.addf %28, %29 : vector<128x128xf32>
    %cst_29 = arith.constant 0.000000e+00 : f32
    %31 = vector.broadcast %cst_29 : f32 to vector<128x128xf32>
    %32 = arith.maximumf %30, %31 : vector<128x128xf32>
    %c0_30 = arith.constant 0 : index
    %c0_31 = arith.constant 0 : index
    %33 = vector.load %arg11[%c0_30, %c0_31] : memref<128x128xf32, #tpu.memory_space<vmem>>, vector<128x128xf32>
    %c0_32 = arith.constant 0 : index
    %c0_33 = arith.constant 0 : index
    %34 = vector.load %arg12[%c0_32, %c0_33] : memref<1x128xf32, #tpu.memory_space<vmem>>, vector<1x128xf32>
    %c0_34 = arith.constant 0 : index
    %c0_35 = arith.constant 0 : index
    %35 = vector.load %arg13[%c0_34, %c0_35] : memref<128x128xf32, #tpu.memory_space<vmem>>, vector<128x128xf32>
    %c0_36 = arith.constant 0 : index
    %c0_37 = arith.constant 0 : index
    %36 = vector.load %arg14[%c0_36, %c0_37] : memref<1x128xf32, #tpu.memory_space<vmem>>, vector<1x128xf32>
    %cst_38 = arith.constant dense<0.000000e+00> : vector<128x128xf32>
    %37 = tpu.matmul %0, %32, %cst_38 {dimension_numbers = #tpu.dot_dimension_numbers<[1], [0], [0], [1], [0, 0, 1, 1], [], []>} : vector<128x128xf32>, vector<128x128xf32>, vector<128x128xf32> -> vector<128x128xf32>
    %cst_39 = arith.constant dense<0.000000e+00> : vector<128x128xf32>
    %38 = tpu.matmul %37, %33, %cst_39 {dimension_numbers = #tpu.dot_dimension_numbers<[1], [0], [0], [1], [0, 0, 1, 1], [], []>} : vector<128x128xf32>, vector<128x128xf32>, vector<128x128xf32> -> vector<128x128xf32>
    %39 = vector.broadcast %34 : vector<1x128xf32> to vector<128x128xf32>
    %40 = arith.addf %38, %39 : vector<128x128xf32>
    %cst_40 = arith.constant 0.000000e+00 : f32
    %41 = vector.broadcast %cst_40 : f32 to vector<128x128xf32>
    %42 = arith.maximumf %40, %41 : vector<128x128xf32>
    %cst_41 = arith.constant dense<0.000000e+00> : vector<128x128xf32>
    %43 = tpu.matmul %42, %35, %cst_41 {dimension_numbers = #tpu.dot_dimension_numbers<[1], [0], [0], [1], [0, 0, 1, 1], [], []>} : vector<128x128xf32>, vector<128x128xf32>, vector<128x128xf32> -> vector<128x128xf32>
    %44 = vector.broadcast %36 : vector<1x128xf32> to vector<128x128xf32>
    %45 = arith.addf %43, %44 : vector<128x128xf32>
    %cst_42 = arith.constant 0.000000e+00 : f32
    %46 = vector.broadcast %cst_42 : f32 to vector<128x128xf32>
    %47 = arith.maximumf %45, %46 : vector<128x128xf32>
    %cst_43 = arith.constant dense<0.000000e+00> : vector<8x128xf32>
    %48 = tpu.matmul %1, %17, %cst_43 {dimension_numbers = #tpu.dot_dimension_numbers<[1], [0], [0], [1], [0, 0, 1, 1], [], []>} : vector<8x128xf32>, vector<128x128xf32>, vector<8x128xf32> -> vector<8x128xf32>
    %cst_44 = arith.constant dense<0.000000e+00> : vector<8x128xf32>
    %49 = tpu.matmul %1, %32, %cst_44 {dimension_numbers = #tpu.dot_dimension_numbers<[1], [0], [0], [1], [0, 0, 1, 1], [], []>} : vector<8x128xf32>, vector<128x128xf32>, vector<8x128xf32> -> vector<8x128xf32>
    %cst_45 = arith.constant dense<0.000000e+00> : vector<8x128xf32>
    %50 = tpu.matmul %1, %47, %cst_45 {dimension_numbers = #tpu.dot_dimension_numbers<[1], [0], [0], [1], [0, 0, 1, 1], [], []>} : vector<8x128xf32>, vector<128x128xf32>, vector<8x128xf32> -> vector<8x128xf32>
    %c0_46 = arith.constant 0 : index
    %c0_47 = arith.constant 0 : index
    %51 = vector.load %arg15[%c0_46, %c0_47] : memref<128x128xf32, #tpu.memory_space<vmem>>, vector<128x128xf32>
    %cst_48 = arith.constant dense<0.000000e+00> : vector<8x128xf32>
    %52 = tpu.matmul %48, %51, %cst_48 {dimension_numbers = #tpu.dot_dimension_numbers<[1], [0], [0], [1], [0, 0, 1, 1], [], []>} : vector<8x128xf32>, vector<128x128xf32>, vector<8x128xf32> -> vector<8x128xf32>
    %c0_49 = arith.constant 0 : index
    %c0_50 = arith.constant 0 : index
    %53 = vector.load %arg16[%c0_49, %c0_50] : memref<128x128xf32, #tpu.memory_space<vmem>>, vector<128x128xf32>
    %cst_51 = arith.constant dense<0.000000e+00> : vector<8x128xf32>
    %54 = tpu.matmul %49, %53, %cst_51 {dimension_numbers = #tpu.dot_dimension_numbers<[1], [0], [0], [1], [0, 0, 1, 1], [], []>} : vector<8x128xf32>, vector<128x128xf32>, vector<8x128xf32> -> vector<8x128xf32>
    %55 = arith.addf %52, %54 : vector<8x128xf32>
    %c0_52 = arith.constant 0 : index
    %c0_53 = arith.constant 0 : index
    %56 = vector.load %arg17[%c0_52, %c0_53] : memref<128x128xf32, #tpu.memory_space<vmem>>, vector<128x128xf32>
    %cst_54 = arith.constant dense<0.000000e+00> : vector<8x128xf32>
    %57 = tpu.matmul %50, %56, %cst_54 {dimension_numbers = #tpu.dot_dimension_numbers<[1], [0], [0], [1], [0, 0, 1, 1], [], []>} : vector<8x128xf32>, vector<128x128xf32>, vector<8x128xf32> -> vector<8x128xf32>
    %58 = arith.addf %55, %57 : vector<8x128xf32>
    %c0_55 = arith.constant 0 : index
    %c0_56 = arith.constant 0 : index
    %59 = vector.load %arg18[%c0_55, %c0_56] : memref<1x128xf32, #tpu.memory_space<vmem>>, vector<1x128xf32>
    %60 = vector.broadcast %59 : vector<1x128xf32> to vector<8x128xf32>
    %61 = arith.addf %58, %60 : vector<8x128xf32>
    %cst_57 = arith.constant 0.000000e+00 : f32
    %62 = vector.broadcast %cst_57 : f32 to vector<8x128xf32>
    %63 = arith.maximumf %61, %62 : vector<8x128xf32>
    %c0_58 = arith.constant 0 : index
    %c0_59 = arith.constant 0 : index
    %64 = vector.load %arg19[%c0_58, %c0_59] : memref<128x128xf32, #tpu.memory_space<vmem>>, vector<128x128xf32>
    %cst_60 = arith.constant dense<0.000000e+00> : vector<8x128xf32>
    %65 = tpu.matmul %63, %64, %cst_60 {dimension_numbers = #tpu.dot_dimension_numbers<[1], [0], [0], [1], [0, 0, 1, 1], [], []>} : vector<8x128xf32>, vector<128x128xf32>, vector<8x128xf32> -> vector<8x128xf32>
    %c0_61 = arith.constant 0 : index
    %c0_62 = arith.constant 0 : index
    %66 = vector.load %arg20[%c0_61, %c0_62] : memref<1x128xf32, #tpu.memory_space<vmem>>, vector<1x128xf32>
    %67 = vector.broadcast %66 : vector<1x128xf32> to vector<8x128xf32>
    %68 = arith.addf %65, %67 : vector<8x128xf32>
    %c0_63 = arith.constant 0 : index
    %c0_64 = arith.constant 0 : index
    %69 = vector.load %arg21[%c0_63, %c0_64] : memref<8x128xf32, #tpu.memory_space<vmem>>, vector<8x128xf32>
    tpu.vector_store %arg21[%c0_63, %c0_64], %68 {strides = array<i32>} : memref<8x128xf32, #tpu.memory_space<vmem>>, vector<8x128xf32>,
    return
  }
}

</mosaic_0001>

<llo_original>
// kernel: gin_forward_impl.1
$region0: #{gin_forward_impl.1}
  #allocation0 [shape = 'u32[]', space=smem, size = 0x4, offset = 0x4, fixed_abs, tag = 'smem constant byte address 0x4 - core index']
  #allocation1 [shape = 'u32[144,128]{1,0:T(1,128)}', space=vmem, size = 0x12000, scoped, tag = 'internal scratch']
  %s0 = inlined_call_operand.vmem [shape: f32[128,128], index: 0, kind: input, shape index: {}]
  %s1 = inlined_call_operand.vmem [shape: f32[128,128], index: 1, kind: input, shape index: {}]
  %s2 = inlined_call_operand.vmem [shape: f32[8,128], index: 2, kind: input, shape index: {}]
  %s3 = inlined_call_operand.vmem [shape: f32[128,128], index: 3, kind: input, shape index: {}]
  %s4 = inlined_call_operand.vmem [shape: f32[1,128], index: 4, kind: input, shape index: {}]
  %s5 = inlined_call_operand.vmem [shape: f32[128,128], index: 5, kind: input, shape index: {}]
  %s6 = inlined_call_operand.vmem [shape: f32[1,128], index: 6, kind: input, shape index: {}]
  %s7 = inlined_call_operand.vmem [shape: f32[128,128], index: 7, kind: input, shape index: {}]
  %s8 = inlined_call_operand.vmem [shape: f32[1,128], index: 8, kind: input, shape index: {}]
  %s9 = inlined_call_operand.vmem [shape: f32[128,128], index: 9, kind: input, shape index: {}]
  %s10 = inlined_call_operand.vmem [shape: f32[1,128], index: 10, kind: input, shape index: {}]
  %s11 = inlined_call_operand.vmem [shape: f32[128,128], index: 11, kind: input, shape index: {}]
  %s12 = inlined_call_operand.vmem [shape: f32[1,128], index: 12, kind: input, shape index: {}]
  %s13 = inlined_call_operand.vmem [shape: f32[128,128], index: 13, kind: input, shape index: {}]
  %s14 = inlined_call_operand.vmem [shape: f32[1,128], index: 14, kind: input, shape index: {}]
  %s15 = inlined_call_operand.vmem [shape: f32[128,128], index: 15, kind: input, shape index: {}]
  %s16 = inlined_call_operand.vmem [shape: f32[128,128], index: 16, kind: input, shape index: {}]
  %s17 = inlined_call_operand.vmem [shape: f32[128,128], index: 17, kind: input, shape index: {}]
  %s18 = inlined_call_operand.vmem [shape: f32[1,128], index: 18, kind: input, shape index: {}]
  %s19 = inlined_call_operand.vmem [shape: f32[128,128], index: 19, kind: input, shape index: {}]
  %s20 = inlined_call_operand.vmem [shape: f32[1,128], index: 20, kind: input, shape index: {}]
  %s21 = inlined_call_operand.vmem [shape: f32[8,128], index: 21, kind: output, shape index: {}]
  %s22 = sld [smem:[#allocation0]]
  $region94: #{gin_forward_impl.1} parent=0
    _
  %s24 = ssub.s32 1, %s22
  %s25 = scalar_select 0, %s24, %s22
  // Predicated region
  $region2: #{gin_forward_impl.1} parent=0 // pred_check
    _
  $region3: #{gin_forward_impl.1} parent=0 // pred_check_branch
    %27 = sbr.rel (0) target = $region5
  $region4: #{gin_forward_impl.1} parent=0 // pred_region
    _
  $region5: #{gin_forward_impl.1} parent=0 // pred_fallthru
    _
  // Predicated region
  $region6: #{gin_forward_impl.1} parent=0 // pred_check
    _
  $region7: #{gin_forward_impl.1} parent=0 // pred_check_branch
    %29 = sbr.rel (0) target = $region9
  $region8: #{gin_forward_impl.1} parent=0 // pred_region
    _
  $region9: #{gin_forward_impl.1} parent=0 // pred_fallthru
    _
  // Predicated region
  $region10: #{gin_forward_impl.1} parent=0 // pred_check
    _
  $region11: #{gin_forward_impl.1} parent=0 // pred_check_branch
    %31 = sbr.rel (0) target = $region13
  $region12: #{gin_forward_impl.1} parent=0 // pred_region
    _
  $region13: #{gin_forward_impl.1} parent=0 // pred_fallthru
    _
  // Predicated region
  $region14: #{gin_forward_impl.1} parent=0 // pred_check
    _
  $region15: #{gin_forward_impl.1} parent=0 // pred_check_branch
    %33 = sbr.rel (0) target = $region17
  $region16: #{gin_forward_impl.1} parent=0 // pred_region
    _
  $region17: #{gin_forward_impl.1} parent=0 // pred_fallthru
    _
  // Predicated region
  $region18: #{gin_forward_impl.1} parent=0 // pred_check
    _
  $region19: #{gin_forward_impl.1} parent=0 // pred_check_branch
    %35 = sbr.rel (0) target = $region21
  $region20: #{gin_forward_impl.1} parent=0 // pred_region
    _
  $region21: #{gin_forward_impl.1} parent=0 // pred_fallthru
    _
  // Predicated region
  $region22: #{gin_forward_impl.1} parent=0 // pred_check
    _
  $region23: #{gin_forward_impl.1} parent=0 // pred_check_branch
    %37 = sbr.rel (0) target = $region25
  $region24: #{gin_forward_impl.1} parent=0 // pred_region
    _
  $region25: #{gin_forward_impl.1} parent=0 // pred_fallthru
    _
  // Predicated region
  $region26: #{gin_forward_impl.1} parent=0 // pred_check
    _
  $region27: #{gin_forward_impl.1} parent=0 // pred_check_branch
    %39 = sbr.rel (0) target = $region29
  $region28: #{gin_forward_impl.1} parent=0 // pred_region
    _
  $region29: #{gin_forward_impl.1} parent=0 // pred_fallthru
    _
  // Predicated region
  $region30: #{gin_forward_impl.1} parent=0 // pred_check
    _
  $region31: #{gin_forward_impl.1} parent=0 // pred_check_branch
    %41 = sbr.rel (0) target = $region33
  $region32: #{gin_forward_impl.1} parent=0 // pred_region
    _
  $region33: #{gin_forward_impl.1} parent=0 // pred_fallthru
    _
  // Predicated region
  $region34: #{gin_forward_impl.1} parent=0 // pred_check
    _
  $region35: #{gin_forward_impl.1} parent=0 // pred_check_branch
    %43 = sbr.rel (0) target = $region37
  $region36: #{gin_forward_impl.1} parent=0 // pred_region
    _
  $region37: #{gin_forward_impl.1} parent=0 // pred_fallthru
    _
  // Predicated region
  $region38: #{gin_forward_impl.1} parent=0 // pred_check
    _
  $region39: #{gin_forward_impl.1} parent=0 // pred_check_branch
    %45 = sbr.rel (0) target = $region41
  $region40: #{gin_forward_impl.1} parent=0 // pred_region
    _
  $region41: #{gin_forward_impl.1} parent=0 // pred_fallthru
    _
  // Predicated region
  $region42: #{gin_forward_impl.1} parent=0 // pred_check
    _
  $region43: #{gin_forward_impl.1} parent=0 // pred_check_branch
    %47 = sbr.rel (0) target = $region45
  $region44: #{gin_forward_impl.1} parent=0 // pred_region
    _
  $region45: #{gin_forward_impl.1} parent=0 // pred_fallthru
    _
  // Predicated region
  $region46: #{gin_forward_impl.1} parent=0 // pred_check
    _
  $region47: #{gin_forward_impl.1} parent=0 // pred_check_branch
    %49 = sbr.rel (0) target = $region49
  $region48: #{gin_forward_impl.1} parent=0 // pred_region
    _
  $region49: #{gin_forward_impl.1} parent=0 // pred_fallthru
    _
  // Predicated region
  $region50: #{gin_forward_impl.1} parent=0 // pred_check
    _
  $region51: #{gin_forward_impl.1} parent=0 // pred_check_branch
    %51 = sbr.rel (0) target = $region53
  $region52: #{gin_forward_impl.1} parent=0 // pred_region
    _
  $region53: #{gin_forward_impl.1} parent=0 // pred_fallthru
    _
  // Predicated region
  $region54: #{gin_forward_impl.1} parent=0 // pred_check
    _
  $region55: #{gin_forward_impl.1} parent=0 // pred_check_branch
    %53 = sbr.rel (0) target = $region57
  $region56: #{gin_forward_impl.1} parent=0 // pred_region
    _
  $region57: #{gin_forward_impl.1} parent=0 // pred_fallthru
    _
  // Predicated region
  $region58: #{gin_forward_impl.1} parent=0 // pred_check
    _
  $region59: #{gin_forward_impl.1} parent=0 // pred_check_branch
    %55 = sbr.rel (0) target = $region61
  $region60: #{gin_forward_impl.1} parent=0 // pred_region
    _
  $region61: #{gin_forward_impl.1} parent=0 // pred_fallthru
    _
  // Predicated region
  $region62: #{gin_forward_impl.1} parent=0 // pred_check
    _
  $region63: #{gin_forward_impl.1} parent=0 // pred_check_branch
    %57 = sbr.rel (0) target = $region65
  $region64: #{gin_forward_impl.1} parent=0 // pred_region
    _
  $region65: #{gin_forward_impl.1} parent=0 // pred_fallthru
    _
  // Predicated region
  $region66: #{gin_forward_impl.1} parent=0 // pred_check
    _
  $region67: #{gin_forward_impl.1} parent=0 // pred_check_branch
    %59 = sbr.rel (0) target = $region69
  $region68: #{gin_forward_impl.1} parent=0 // pred_region
    _
  $region69: #{gin_forward_impl.1} parent=0 // pred_fallthru
    _
  // Predicated region
  $region70: #{gin_forward_impl.1} parent=0 // pred_check
    _
  $region71: #{gin_forward_impl.1} parent=0 // pred_check_branch
    %61 = sbr.rel (0) target = $region73
  $region72: #{gin_forward_impl.1} parent=0 // pred_region
    _
  $region73: #{gin_forward_impl.1} parent=0 // pred_fallthru
    _
  // Predicated region
  $region74: #{gin_forward_impl.1} parent=0 // pred_check
    _
  $region75: #{gin_forward_impl.1} parent=0 // pred_check_branch
    %63 = sbr.rel (0) target = $region77
  $region76: #{gin_forward_impl.1} parent=0 // pred_region
    _
  $region77: #{gin_forward_impl.1} parent=0 // pred_fallthru
    _
  // Predicated region
  $region78: #{gin_forward_impl.1} parent=0 // pred_check
    _
  $region79: #{gin_forward_impl.1} parent=0 // pred_check_branch
    %65 = sbr.rel (0) target = $region81
  $region80: #{gin_forward_impl.1} parent=0 // pred_region
    _
  $region81: #{gin_forward_impl.1} parent=0 // pred_fallthru
    _
  // Predicated region
  $region82: #{gin_forward_impl.1} parent=0 // pred_check
    _
  $region83: #{gin_forward_impl.1} parent=0 // pred_check_branch
    %67 = sbr.rel (0) target = $region85
  $region84: #{gin_forward_impl.1} parent=0 // pred_region
    _
  $region85: #{gin_forward_impl.1} parent=0 // pred_fallthru
    _
  %v68 = vld [vmem:[%s0] sm:$0xff]
  %v69 = vld [vmem:[%s0 + $0x8] sm:$0xff]
  %v70 = vld [vmem:[%s0 + $0x10] sm:$0xff]
  %v71 = vld [vmem:[%s0 + $0x18] sm:$0xff]
  %v72 = vld [vmem:[%s0 + $0x20] sm:$0xff]
  %v73 = vld [vmem:[%s0 + $0x28] sm:$0xff]
  %v74 = vld [vmem:[%s0 + $0x30] sm:$0xff]
  %v75 = vld [vmem:[%s0 + $0x38] sm:$0xff]
  %v76 = vld [vmem:[%s0 + $0x40] sm:$0xff]
  %v77 = vld [vmem:[%s0 + $0x48] sm:$0xff]
  %v78 = vld [vmem:[%s0 + $0x50] sm:$0xff]
  %v79 = vld [vmem:[%s0 + $0x58] sm:$0xff]
  %v80 = vld [vmem:[%s0 + $0x60] sm:$0xff]
  %v81 = vld [vmem:[%s0 + $0x68] sm:$0xff]
  %v82 = vld [vmem:[%s0 + $0x70] sm:$0xff]
  %v83 = vld [vmem:[%s0 + $0x78] sm:$0xff]
  %v84 = vld [vmem:[%s2] sm:$0xff]
  %v85 = vld [vmem:[%s1] sm:$0xff]
  %v86 = vld [vmem:[%s1 + $0x8] sm:$0xff]
  %v87 = vld [vmem:[%s1 + $0x10] sm:$0xff]
  %v88 = vld [vmem:[%s1 + $0x18] sm:$0xff]
  %v89 = vld [vmem:[%s1 + $0x20] sm:$0xff]
  %v90 = vld [vmem:[%s1 + $0x28] sm:$0xff]
  %v91 = vld [vmem:[%s1 + $0x30] sm:$0xff]
  %v92 = vld [vmem:[%s1 + $0x38] sm:$0xff]
  %v93 = vld [vmem:[%s1 + $0x40] sm:$0xff]
  %v94 = vld [vmem:[%s1 + $0x48] sm:$0xff]
  %v95 = vld [vmem:[%s1 + $0x50] sm:$0xff]
  %v96 = vld [vmem:[%s1 + $0x58] sm:$0xff]
  %v97 = vld [vmem:[%s1 + $0x60] sm:$0xff]
  %v98 = vld [vmem:[%s1 + $0x68] sm:$0xff]
  %v99 = vld [vmem:[%s1 + $0x70] sm:$0xff]
  %v100 = vld [vmem:[%s1 + $0x78] sm:$0xff]
  %v101 = vld [vmem:[%s3] sm:$0xff]
  %v102 = vld [vmem:[%s3 + $0x8] sm:$0xff]
  %v103 = vld [vmem:[%s3 + $0x10] sm:$0xff]
  %v104 = vld [vmem:[%s3 + $0x18] sm:$0xff]
  %v105 = vld [vmem:[%s3 + $0x20] sm:$0xff]
  %v106 = vld [vmem:[%s3 + $0x28] sm:$0xff]
  %v107 = vld [vmem:[%s3 + $0x30] sm:$0xff]
  %v108 = vld [vmem:[%s3 + $0x38] sm:$0xff]
  %v109 = vld [vmem:[%s3 + $0x40] sm:$0xff]
  %v110 = vld [vmem:[%s3 + $0x48] sm:$0xff]
  %v111 = vld [vmem:[%s3 + $0x50] sm:$0xff]
  %v112 = vld [vmem:[%s3 + $0x58] sm:$0xff]
  %v113 = vld [vmem:[%s3 + $0x60] sm:$0xff]
  %v114 = vld [vmem:[%s3 + $0x68] sm:$0xff]
  %v115 = vld [vmem:[%s3 + $0x70] sm:$0xff]
  %v116 = vld [vmem:[%s3 + $0x78] sm:$0xff]
  %v117 = vld [vmem:[%s4] sm:$0x1]
  %v118 = vld [vmem:[%s5] sm:$0xff]
  %v119 = vld [vmem:[%s5 + $0x8] sm:$0xff]
  %v120 = vld [vmem:[%s5 + $0x10] sm:$0xff]
  %v121 = vld [vmem:[%s5 + $0x18] sm:$0xff]
  %v122 = vld [vmem:[%s5 + $0x20] sm:$0xff]
  %v123 = vld [vmem:[%s5 + $0x28] sm:$0xff]
  %v124 = vld [vmem:[%s5 + $0x30] sm:$0xff]
  %v125 = vld [vmem:[%s5 + $0x38] sm:$0xff]
  %v126 = vld [vmem:[%s5 + $0x40] sm:$0xff]
  %v127 = vld [vmem:[%s5 + $0x48] sm:$0xff]
  %v128 = vld [vmem:[%s5 + $0x50] sm:$0xff]
  %v129 = vld [vmem:[%s5 + $0x58] sm:$0xff]
  %v130 = vld [vmem:[%s5 + $0x60] sm:$0xff]
  %v131 = vld [vmem:[%s5 + $0x68] sm:$0xff]
  %v132 = vld [vmem:[%s5 + $0x70] sm:$0xff]
  %v133 = vld [vmem:[%s5 + $0x78] sm:$0xff]
  %v134 = vld [vmem:[%s6] sm:$0x1]
  %135 = vmatprep.subr.mxu0 0.0
  %136 = vmatpush1.msra.mxu0 %v85
  %137 = vmatprep.subr.mxu0 0.0
  %138 = vmatpush1.msra.mxu0 %v86
  %139 = vmatprep.subr.mxu0 0.0
  %140 = vmatpush1.msra.mxu0 %v87
  %141 = vmatprep.subr.mxu0 0.0
  %142 = vmatpush1.msra.mxu0 %v88
  %143 = vmatprep.subr.mxu0 0.0
  %144 = vmatpush1.msra.mxu0 %v89
  %145 = vmatprep.subr.mxu0 0.0
  %146 = vmatpush1.msra.mxu0 %v90
  %147 = vmatprep.subr.mxu0 0.0
  %148 = vmatpush1.msra.mxu0 %v91
  %149 = vmatprep.subr.mxu0 0.0
  %150 = vmatpush1.msra.mxu0 %v92
  %151 = vmatprep.subr.mxu0 0.0
  %152 = vmatpush1.msra.mxu0 %v93
  %153 = vmatprep.subr.mxu0 0.0
  %154 = vmatpush1.msra.mxu0 %v94
  %155 = vmatprep.subr.mxu0 0.0
  %156 = vmatpush1.msra.mxu0 %v95
  %157 = vmatprep.subr.mxu0 0.0
  %158 = vmatpush1.msra.mxu0 %v96
  %159 = vmatprep.subr.mxu0 0.0
  %160 = vmatpush1.msra.mxu0 %v97
  %161 = vmatprep.subr.mxu0 0.0
  %162 = vmatpush1.msra.mxu0 %v98
  %163 = vmatprep.subr.mxu0 0.0
  %164 = vmatpush1.msra.mxu0 %v99
  %165 = vmatprep.subr.mxu0 0.0
  %166 = vmatpush1.msra.mxu0 %v100
  %167 = vmatprep.subr.mxu0 0.0
  %168 = vmatpush1.msra.mxu0 0.0
  %169 = vmatprep.subr.mxu0 0.0
  %170 = vmatpush1.msra.mxu0 0.0
  %171 = vmatprep.subr.mxu0 0.0
  %172 = vmatpush1.msra.mxu0 0.0
  %173 = vmatprep.subr.mxu0 0.0
  %174 = vmatpush1.msra.mxu0 0.0
  %175 = vmatprep.subr.mxu0 0.0
  %176 = vmatpush1.msra.mxu0 0.0
  %177 = vmatprep.subr.mxu0 0.0
  %178 = vmatpush1.msra.mxu0 0.0
  %179 = vmatprep.subr.mxu0 0.0
  %180 = vmatpush1.msra.mxu0 0.0
  %181 = vmatprep.subr.mxu0 0.0
  %182 = vmatpush1.msra.mxu0 0.0
  %183 = vmatprep.subr.mxu0 0.0
  %184 = vmatpush1.msra.mxu0 0.0
  %185 = vmatprep.subr.mxu0 0.0
  %186 = vmatpush1.msra.mxu0 0.0
  %187 = vmatprep.subr.mxu0 0.0
  %188 = vmatpush1.msra.mxu0 0.0
  %189 = vmatprep.subr.mxu0 0.0
  %190 = vmatpush1.msra.mxu0 0.0
  %191 = vmatprep.subr.mxu0 0.0
  %192 = vmatpush1.msra.mxu0 0.0
  %193 = vmatprep.subr.mxu0 0.0
  %194 = vmatpush1.msra.mxu0 0.0
  %195 = vmatprep.subr.mxu0 0.0
  %196 = vmatpush1.msra.mxu0 0.0
  %197 = vmatprep.subr.mxu0 0.0
  %198 = vmatpush1.msra.mxu0 0.0
  %199 = vmatprep.mubr.f32.mxu0 0.0
  %200 = vmatmul.mubr.f32.gmra.mrb[0].mxu0 %v68
  %v201 = vpop.f32.mrb[0].mxu0
  %v202 = vadd.f32 0.0, %v201
  %v203 = vpop.f32.mrb[0].mxu0
  %204 = vmatprep.mubr.f32.mxu0 0.0
  %205 = vmatmul.mubr.f32.gmra.mrb[0].mxu0 %v69
  %v206 = vpop.f32.mrb[0].mxu0
  %v207 = vadd.f32 0.0, %v206
  %v208 = vpop.f32.mrb[0].mxu0
  %209 = vmatprep.mubr.f32.mxu0 0.0
  %210 = vmatmul.mubr.f32.gmra.mrb[0].mxu0 %v70
  %v211 = vpop.f32.mrb[0].mxu0
  %v212 = vadd.f32 0.0, %v211
  %v213 = vpop.f32.mrb[0].mxu0
  %214 = vmatprep.mubr.f32.mxu0 0.0
  %215 = vmatmul.mubr.f32.gmra.mrb[0].mxu0 %v71
  %v216 = vpop.f32.mrb[0].mxu0
  %v217 = vadd.f32 0.0, %v216
  %v218 = vpop.f32.mrb[0].mxu0
  %219 = vmatprep.mubr.f32.mxu0 0.0
  %220 = vmatmul.mubr.f32.gmra.mrb[0].mxu0 %v72
  %v221 = vpop.f32.mrb[0].mxu0
  %v222 = vadd.f32 0.0, %v221
  %v223 = vpop.f32.mrb[0].mxu0
  %224 = vmatprep.mubr.f32.mxu0 0.0
  %225 = vmatmul.mubr.f32.gmra.mrb[0].mxu0 %v73
  %v226 = vpop.f32.mrb[0].mxu0
  %v227 = vadd.f32 0.0, %v226
  %v228 = vpop.f32.mrb[0].mxu0
  %229 = vmatprep.mubr.f32.mxu0 0.0
  %230 = vmatmul.mubr.f32.gmra.mrb[0].mxu0 %v74
  %v231 = vpop.f32.mrb[0].mxu0
  %v232 = vadd.f32 0.0, %v231
  %v233 = vpop.f32.mrb[0].mxu0
  %234 = vmatprep.mubr.f32.mxu0 0.0
  %235 = vmatmul.mubr.f32.gmra.mrb[0].mxu0 %v75
  %v236 = vpop.f32.mrb[0].mxu0
  %v237 = vadd.f32 0.0, %v236
  %v238 = vpop.f32.mrb[0].mxu0
  %239 = vmatprep.mubr.f32.mxu0 0.0
  %240 = vmatmul.mubr.f32.gmra.mrb[0].mxu0 %v76
  %v241 = vpop.f32.mrb[0].mxu0
  %v242 = vadd.f32 0.0, %v241
  %v243 = vpop.f32.mrb[0].mxu0
  %244 = vmatprep.mubr.f32.mxu0 0.0
  %245 = vmatmul.mubr.f32.gmra.mrb[0].mxu0 %v77
  %v246 = vpop.f32.mrb[0].mxu0
  %v247 = vadd.f32 0.0, %v246
  %v248 = vpop.f32.mrb[0].mxu0
  %249 = vmatprep.mubr.f32.mxu0 0.0
  %250 = vmatmul.mubr.f32.gmra.mrb[0].mxu0 %v78
  %v251 = vpop.f32.mrb[0].mxu0
  %v252 = vadd.f32 0.0, %v251
  %v253 = vpop.f32.mrb[0].mxu0
  %254 = vmatprep.mubr.f32.mxu0 0.0
  %255 = vmatmul.mubr.f32.gmra.mrb[0].mxu0 %v79
  %v256 = vpop.f32.mrb[0].mxu0
  %v257 = vadd.f32 0.0, %v256
  %v258 = vpop.f32.mrb[0].mxu0
  %259 = vmatprep.mubr.f32.mxu0 0.0
  %260 = vmatmul.mubr.f32.gmra.mrb[0].mxu0 %v80
  %v261 = vpop.f32.mrb[0].mxu0
  %v262 = vadd.f32 0.0, %v261
  %v263 = vpop.f32.mrb[0].mxu0
  %264 = vmatprep.mubr.f32.mxu0 0.0
  %265 = vmatmul.mubr.f32.gmra.mrb[0].mxu0 %v81
  %v266 = vpop.f32.mrb[0].mxu0
  %v267 = vadd.f32 0.0, %v266
  %v268 = vpop.f32.mrb[0].mxu0
  %269 = vmatprep.mubr.f32.mxu0 0.0
  %270 = vmatmul.mubr.f32.gmra.mrb[0].mxu0 %v82
  %v271 = vpop.f32.mrb[0].mxu0
  %v272 = vadd.f32 0.0, %v271
  %v273 = vpop.f32.mrb[0].mxu0
  %274 = vmatprep.mubr.f32.mxu0 0.0
  %275 = vmatmul.mubr.f32.gmra.mrb[0].mxu0 %v83
  %v276 = vpop.f32.mrb[0].mxu0
  %v277 = vadd.f32 0.0, %v276
  %v278 = vpop.f32.mrb[0].mxu0
  %279 = vdwg.mxu0
  %v281 = vlaneseq
  %v282 = vshrl.u32 %v281, 7
  %v283 = vsub.s32 0, %v282
  %v284 = vrot.slane %v117, %v283
  %286 = vmatprep.subr.mxu0 0.0
  %287 = vmatpush1.msra.mxu0 %v101
  %288 = vmatprep.subr.mxu0 0.0
  %289 = vmatpush1.msra.mxu0 %v102
  %290 = vmatprep.subr.mxu0 0.0
  %291 = vmatpush1.msra.mxu0 %v103
  %292 = vmatprep.subr.mxu0 0.0
  %293 = vmatpush1.msra.mxu0 %v104
  %294 = vmatprep.subr.mxu0 0.0
  %295 = vmatpush1.msra.mxu0 %v105
  %296 = vmatprep.subr.mxu0 0.0
  %297 = vmatpush1.msra.mxu0 %v106
  %298 = vmatprep.subr.mxu0 0.0
  %299 = vmatpush1.msra.mxu0 %v107
  %300 = vmatprep.subr.mxu0 0.0
  %301 = vmatpush1.msra.mxu0 %v108
  %302 = vmatprep.subr.mxu0 0.0
  %303 = vmatpush1.msra.mxu0 %v109
  %304 = vmatprep.subr.mxu0 0.0
  %305 = vmatpush1.msra.mxu0 %v110
  %306 = vmatprep.subr.mxu0 0.0
  %307 = vmatpush1.msra.mxu0 %v111
  %308 = vmatprep.subr.mxu0 0.0
  %309 = vmatpush1.msra.mxu0 %v112
  %310 = vmatprep.subr.mxu0 0.0
  %311 = vmatpush1.msra.mxu0 %v113
  %312 = vmatprep.subr.mxu0 0.0
  %313 = vmatpush1.msra.mxu0 %v114
  %314 = vmatprep.subr.mxu0 0.0
  %315 = vmatpush1.msra.mxu0 %v115
  %316 = vmatprep.subr.mxu0 0.0
  %317 = vmatpush1.msra.mxu0 %v116
  %318 = vmatprep.subr.mxu0 0.0
  %319 = vmatpush1.msra.mxu0 0.0
  %320 = vmatprep.subr.mxu0 0.0
  %321 = vmatpush1.msra.mxu0 0.0
  %322 = vmatprep.subr.mxu0 0.0
  %323 = vmatpush1.msra.mxu0 0.0
  %324 = vmatprep.subr.mxu0 0.0
  %325 = vmatpush1.msra.mxu0 0.0
  %326 = vmatprep.subr.mxu0 0.0
  %327 = vmatpush1.msra.mxu0 0.0
  %328 = vmatprep.subr.mxu0 0.0
  %329 = vmatpush1.msra.mxu0 0.0
  %330 = vmatprep.subr.mxu0 0.0
  %331 = vmatpush1.msra.mxu0 0.0
  %332 = vmatprep.subr.mxu0 0.0
  %333 = vmatpush1.msra.mxu0 0.0
  %334 = vmatprep.subr.mxu0 0.0
  %335 = vmatpush1.msra.mxu0 0.0
  %336 = vmatprep.subr.mxu0 0.0
  %337 = vmatpush1.msra.mxu0 0.0
  %338 = vmatprep.subr.mxu0 0.0
  %339 = vmatpush1.msra.mxu0 0.0
  %340 = vmatprep.subr.mxu0 0.0
  %341 = vmatpush1.msra.mxu0 0.0
  %342 = vmatprep.subr.mxu0 0.0
  %343 = vmatpush1.msra.mxu0 0.0
  %344 = vmatprep.subr.mxu0 0.0
  %345 = vmatpush1.msra.mxu0 0.0
  %346 = vmatprep.subr.mxu0 0.0
  %347 = vmatpush1.msra.mxu0 0.0
  %348 = vmatprep.subr.mxu0 0.0
  %349 = vmatpush1.msra.mxu0 0.0
  %350 = vmatprep.mubr.f32.mxu0 0.0
  %351 = vmatmul.mubr.f32.gmra.mrb[0].mxu0 %v202
  %v352 = vpop.f32.mrb[0].mxu0
  %v353 = vadd.f32 %v284, %v352
  %v354 = vpop.f32.mrb[0].mxu0
  %355 = vmatprep.mubr.f32.mxu0 0.0
  %356 = vmatmul.mubr.f32.gmra.mrb[0].mxu0 %v207
  %v357 = vpop.f32.mrb[0].mxu0
  %v358 = vadd.f32 %v284, %v357
  %v359 = vpop.f32.mrb[0].mxu0
  %360 = vmatprep.mubr.f32.mxu0 0.0
  %361 = vmatmul.mubr.f32.gmra.mrb[0].mxu0 %v212
  %v362 = vpop.f32.mrb[0].mxu0
  %v363 = vadd.f32 %v284, %v362
  %v364 = vpop.f32.mrb[0].mxu0
  %365 = vmatprep.mubr.f32.mxu0 0.0
  %366 = vmatmul.mubr.f32.gmra.mrb[0].mxu0 %v217
  %v367 = vpop.f32.mrb[0].mxu0
  %v368 = vadd.f32 %v284, %v367
  %v369 = vpop.f32.mrb[0].mxu0
  %370 = vmatprep.mubr.f32.mxu0 0.0
  %371 = vmatmul.mubr.f32.gmra.mrb[0].mxu0 %v222
  %v372 = vpop.f32.mrb[0].mxu0
  %v373 = vadd.f32 %v284, %v372
  %v374 = vpop.f32.mrb[0].mxu0
  %375 = vmatprep.mubr.f32.mxu0 0.0
  %376 = vmatmul.mubr.f32.gmra.mrb[0].mxu0 %v227
  %v377 = vpop.f32.mrb[0].mxu0
  %v378 = vadd.f32 %v284, %v377
  %v379 = vpop.f32.mrb[0].mxu0
  %380 = vmatprep.mubr.f32.mxu0 0.0
  %381 = vmatmul.mubr.f32.gmra.mrb[0].mxu0 %v232
  %v382 = vpop.f32.mrb[0].mxu0
  %v383 = vadd.f32 %v284, %v382
  %v384 = vpop.f32.mrb[0].mxu0
  %385 = vmatprep.mubr.f32.mxu0 0.0
  %386 = vmatmul.mubr.f32.gmra.mrb[0].mxu0 %v237
  %v387 = vpop.f32.mrb[0].mxu0
  %v388 = vadd.f32 %v284, %v387
  %v389 = vpop.f32.mrb[0].mxu0
  %390 = vmatprep.mubr.f32.mxu0 0.0
  %391 = vmatmul.mubr.f32.gmra.mrb[0].mxu0 %v242
  %v392 = vpop.f32.mrb[0].mxu0
  %v393 = vadd.f32 %v284, %v392
  %v394 = vpop.f32.mrb[0].mxu0
  %395 = vmatprep.mubr.f32.mxu0 0.0
  %396 = vmatmul.mubr.f32.gmra.mrb[0].mxu0 %v247
  %v397 = vpop.f32.mrb[0].mxu0
  %v398 = vadd.f32 %v284, %v397
  %v399 = vpop.f32.mrb[0].mxu0
  %400 = vmatprep.mubr.f32.mxu0 0.0
  %401 = vmatmul.mubr.f32.gmra.mrb[0].mxu0 %v252
  %v402 = vpop.f32.mrb[0].mxu0
  %v403 = vadd.f32 %v284, %v402
  %v404 = vpop.f32.mrb[0].mxu0
  %405 = vmatprep.mubr.f32.mxu0 0.0
  %406 = vmatmul.mubr.f32.gmra.mrb[0].mxu0 %v257
  %v407 = vpop.f32.mrb[0].mxu0
  %v408 = vadd.f32 %v284, %v407
  %v409 = vpop.f32.mrb[0].mxu0
  %410 = vmatprep.mubr.f32.mxu0 0.0
  %411 = vmatmul.mubr.f32.gmra.mrb[0].mxu0 %v262
  %v412 = vpop.f32.mrb[0].mxu0
  %v413 = vadd.f32 %v284, %v412
  %v414 = vpop.f32.mrb[0].mxu0
  %415 = vmatprep.mubr.f32.mxu0 0.0
  %416 = vmatmul.mubr.f32.gmra.mrb[0].mxu0 %v267
  %v417 = vpop.f32.mrb[0].mxu0
  %v418 = vadd.f32 %v284, %v417
  %v419 = vpop.f32.mrb[0].mxu0
  %420 = vmatprep.mubr.f32.mxu0 0.0
  %421 = vmatmul.mubr.f32.gmra.mrb[0].mxu0 %v272
  %v422 = vpop.f32.mrb[0].mxu0
  %v423 = vadd.f32 %v284, %v422
  %v424 = vpop.f32.mrb[0].mxu0
  %425 = vmatprep.mubr.f32.mxu0 0.0
  %426 = vmatmul.mubr.f32.gmra.mrb[0].mxu0 %v277
  %v427 = vpop.f32.mrb[0].mxu0
  %v428 = vadd.f32 %v284, %v427
  %v429 = vpop.f32.mrb[0].mxu0
  %430 = vdwg.mxu0
  %v431 = vmax.f32 %v353, 0.0
  %v432 = vmax.f32 %v358, 0.0
  %v433 = vmax.f32 %v363, 0.0
  %v434 = vmax.f32 %v368, 0.0
  %v435 = vmax.f32 %v373, 0.0
  %v436 = vmax.f32 %v378, 0.0
  %v437 = vmax.f32 %v383, 0.0
  %v438 = vmax.f32 %v388, 0.0
  %v439 = vmax.f32 %v393, 0.0
  %v440 = vmax.f32 %v398, 0.0
  %v441 = vmax.f32 %v403, 0.0
  %v442 = vmax.f32 %v408, 0.0
  %v443 = vmax.f32 %v413, 0.0
  %v444 = vmax.f32 %v418, 0.0
  %v445 = vmax.f32 %v423, 0.0
  %v446 = vmax.f32 %v428, 0.0
  %v448 = vlaneseq
  %v449 = vshrl.u32 %v448, 7
  %v450 = vsub.s32 0, %v449
  %v451 = vrot.slane %v134, %v450
  %453 = vmatprep.subr.mxu0 0.0
  %454 = vmatpush1.msra.mxu0 %v118
  %455 = vmatprep.subr.mxu0 0.0
  %456 = vmatpush1.msra.mxu0 %v119
  %457 = vmatprep.subr.mxu0 0.0
  %458 = vmatpush1.msra.mxu0 %v120
  %459 = vmatprep.subr.mxu0 0.0
  %460 = vmatpush1.msra.mxu0 %v121
  %461 = vmatprep.subr.mxu0 0.0
  %462 = vmatpush1.msra.mxu0 %v122
  %463 = vmatprep.subr.mxu0 0.0
  %464 = vmatpush1.msra.mxu0 %v123
  %465 = vmatprep.subr.mxu0 0.0
  %466 = vmatpush1.msra.mxu0 %v124
  %467 = vmatprep.subr.mxu0 0.0
  %468 = vmatpush1.msra.mxu0 %v125
  %469 = vmatprep.subr.mxu0 0.0
  %470 = vmatpush1.msra.mxu0 %v126
  %471 = vmatprep.subr.mxu0 0.0
  %472 = vmatpush1.msra.mxu0 %v127
  %473 = vmatprep.subr.mxu0 0.0
  %474 = vmatpush1.msra.mxu0 %v128
  %475 = vmatprep.subr.mxu0 0.0
  %476 = vmatpush1.msra.mxu0 %v129
  %477 = vmatprep.subr.mxu0 0.0
  %478 = vmatpush1.msra.mxu0 %v130
  %479 = vmatprep.subr.mxu0 0.0
  %480 = vmatpush1.msra.mxu0 %v131
  %481 = vmatprep.subr.mxu0 0.0
  %482 = vmatpush1.msra.mxu0 %v132
  %483 = vmatprep.subr.mxu0 0.0
  %484 = vmatpush1.msra.mxu0 %v133
  %485 = vmatprep.subr.mxu0 0.0
  %486 = vmatpush1.msra.mxu0 0.0
  %487 = vmatprep.subr.mxu0 0.0
  %488 = vmatpush1.msra.mxu0 0.0
  %489 = vmatprep.subr.mxu0 0.0
  %490 = vmatpush1.msra.mxu0 0.0
  %491 = vmatprep.subr.mxu0 0.0
  %492 = vmatpush1.msra.mxu0 0.0
  %493 = vmatprep.subr.mxu0 0.0
  %494 = vmatpush1.msra.mxu0 0.0
  %495 = vmatprep.subr.mxu0 0.0
  %496 = vmatpush1.msra.mxu0 0.0
  %497 = vmatprep.subr.mxu0 0.0
  %498 = vmatpush1.msra.mxu0 0.0
  %499 = vmatprep.subr.mxu0 0.0
  %500 = vmatpush1.msra.mxu0 0.0
  %501 = vmatprep.subr.mxu0 0.0
  %502 = vmatpush1.msra.mxu0 0.0
  %503 = vmatprep.subr.mxu0 0.0
  %504 = vmatpush1.msra.mxu0 0.0
  %505 = vmatprep.subr.mxu0 0.0
  %506 = vmatpush1.msra.mxu0 0.0
  %507 = vmatprep.subr.mxu0 0.0
  %508 = vmatpush1.msra.mxu0 0.0
  %509 = vmatprep.subr.mxu0 0.0
  %510 = vmatpush1.msra.mxu0 0.0
  %511 = vmatprep.subr.mxu0 0.0
  %512 = vmatpush1.msra.mxu0 0.0
  %513 = vmatprep.subr.mxu0 0.0
  %514 = vmatpush1.msra.mxu0 0.0
  %515 = vmatprep.subr.mxu0 0.0
  %516 = vmatpush1.msra.mxu0 0.0
  %517 = vmatprep.mubr.f32.mxu0 0.0
  %518 = vmatmul.mubr.f32.gmra.mrb[0].mxu0 %v431
  %v519 = vpop.f32.mrb[0].mxu0
  %v520 = vadd.f32 %v451, %v519
  %v521 = vpop.f32.mrb[0].mxu0
  %522 = vmatprep.mubr.f32.mxu0 0.0
  %523 = vmatmul.mubr.f32.gmra.mrb[0].mxu0 %v432
  %v524 = vpop.f32.mrb[0].mxu0
  %v525 = vadd.f32 %v451, %v524
  %v526 = vpop.f32.mrb[0].mxu0
  %527 = vmatprep.mubr.f32.mxu0 0.0
  %528 = vmatmul.mubr.f32.gmra.mrb[0].mxu0 %v433
  %v529 = vpop.f32.mrb[0].mxu0
  %v530 = vadd.f32 %v451, %v529
  %v531 = vpop.f32.mrb[0].mxu0
  %532 = vmatprep.mubr.f32.mxu0 0.0
  %533 = vmatmul.mubr.f32.gmra.mrb[0].mxu0 %v434
  %v534 = vpop.f32.mrb[0].mxu0
  %v535 = vadd.f32 %v451, %v534
  %v536 = vpop.f32.mrb[0].mxu0
  %537 = vmatprep.mubr.f32.mxu0 0.0
  %538 = vmatmul.mubr.f32.gmra.mrb[0].mxu0 %v435
  %v539 = vpop.f32.mrb[0].mxu0
  %v540 = vadd.f32 %v451, %v539
  %v541 = vpop.f32.mrb[0].mxu0
  %542 = vmatprep.mubr.f32.mxu0 0.0
  %543 = vmatmul.mubr.f32.gmra.mrb[0].mxu0 %v436
  %v544 = vpop.f32.mrb[0].mxu0
  %v545 = vadd.f32 %v451, %v544
  %v546 = vpop.f32.mrb[0].mxu0
  %547 = vmatprep.mubr.f32.mxu0 0.0
  %548 = vmatmul.mubr.f32.gmra.mrb[0].mxu0 %v437
  %v549 = vpop.f32.mrb[0].mxu0
  %v550 = vadd.f32 %v451, %v549
  %v551 = vpop.f32.mrb[0].mxu0
  %552 = vmatprep.mubr.f32.mxu0 0.0
  %553 = vmatmul.mubr.f32.gmra.mrb[0].mxu0 %v438
  %v554 = vpop.f32.mrb[0].mxu0
  %v555 = vadd.f32 %v451, %v554
  %v556 = vpop.f32.mrb[0].mxu0
  %557 = vmatprep.mubr.f32.mxu0 0.0
  %558 = vmatmul.mubr.f32.gmra.mrb[0].mxu0 %v439
  %v559 = vpop.f32.mrb[0].mxu0
  %v560 = vadd.f32 %v451, %v559
  %v561 = vpop.f32.mrb[0].mxu0
  %562 = vmatprep.mubr.f32.mxu0 0.0
  %563 = vmatmul.mubr.f32.gmra.mrb[0].mxu0 %v440
  %v564 = vpop.f32.mrb[0].mxu0
  %v565 = vadd.f32 %v451, %v564
  %v566 = vpop.f32.mrb[0].mxu0
  %567 = vmatprep.mubr.f32.mxu0 0.0
  %568 = vmatmul.mubr.f32.gmra.mrb[0].mxu0 %v441
  %v569 = vpop.f32.mrb[0].mxu0
  %v570 = vadd.f32 %v451, %v569
  %v571 = vpop.f32.mrb[0].mxu0
  %572 = vmatprep.mubr.f32.mxu0 0.0
  %573 = vmatmul.mubr.f32.gmra.mrb[0].mxu0 %v442
  %v574 = vpop.f32.mrb[0].mxu0
  %v575 = vadd.f32 %v451, %v574
  %v576 = vpop.f32.mrb[0].mxu0
  %577 = vmatprep.mubr.f32.mxu0 0.0
  %578 = vmatmul.mubr.f32.gmra.mrb[0].mxu0 %v443
  %v579 = vpop.f32.mrb[0].mxu0
  %v580 = vadd.f32 %v451, %v579
  %v581 = vpop.f32.mrb[0].mxu0
  %582 = vmatprep.mubr.f32.mxu0 0.0
  %583 = vmatmul.mubr.f32.gmra.mrb[0].mxu0 %v444
  %v584 = vpop.f32.mrb[0].mxu0
  %v585 = vadd.f32 %v451, %v584
  %v586 = vpop.f32.mrb[0].mxu0
  %587 = vmatprep.mubr.f32.mxu0 0.0
  %588 = vmatmul.mubr.f32.gmra.mrb[0].mxu0 %v445
  %v589 = vpop.f32.mrb[0].mxu0
  %v590 = vadd.f32 %v451, %v589
  %v591 = vpop.f32.mrb[0].mxu0
  %592 = vmatprep.mubr.f32.mxu0 0.0
  %593 = vmatmul.mubr.f32.gmra.mrb[0].mxu0 %v446
  %v594 = vpop.f32.mrb[0].mxu0
  %v595 = vadd.f32 %v451, %v594
  %v596 = vpop.f32.mrb[0].mxu0
  %597 = vdwg.mxu0
  %v598 = vmax.f32 %v520, 0.0
  %v599 = vmax.f32 %v525, 0.0
  %v600 = vmax.f32 %v530, 0.0
  %v601 = vmax.f32 %v535, 0.0
  %v602 = vmax.f32 %v540, 0.0
  %v603 = vmax.f32 %v545, 0.0
  %v604 = vmax.f32 %v550, 0.0
  %v605 = vmax.f32 %v555, 0.0
  %v606 = vmax.f32 %v560, 0.0
  %v607 = vmax.f32 %v565, 0.0
  %v608 = vmax.f32 %v570, 0.0
  %v609 = vmax.f32 %v575, 0.0
  %v610 = vmax.f32 %v580, 0.0
  %v611 = vmax.f32 %v585, 0.0
  %v612 = vmax.f32 %v590, 0.0
  %v613 = vmax.f32 %v595, 0.0
  %v614 = vld [vmem:[%s7] sm:$0xff]
  %v615 = vld [vmem:[%s7 + $0x8] sm:$0xff]
  %v616 = vld [vmem:[%s7 + $0x10] sm:$0xff]
  %v617 = vld [vmem:[%s7 + $0x18] sm:$0xff]
  %v618 = vld [vmem:[%s7 + $0x20] sm:$0xff]
  %v619 = vld [vmem:[%s7 + $0x28] sm:$0xff]
  %v620 = vld [vmem:[%s7 + $0x30] sm:$0xff]
  %v621 = vld [vmem:[%s7 + $0x38] sm:$0xff]
  %v622 = vld [vmem:[%s7 + $0x40] sm:$0xff]
  %v623 = vld [vmem:[%s7 + $0x48] sm:$0xff]
  %v624 = vld [vmem:[%s7 + $0x50] sm:$0xff]
  %v625 = vld [vmem:[%s7 + $0x58] sm:$0xff]
  %v626 = vld [vmem:[%s7 + $0x60] sm:$0xff]
  %v627 = vld [vmem:[%s7 + $0x68] sm:$0xff]
  %v628 = vld [vmem:[%s7 + $0x70] sm:$0xff]
  %v629 = vld [vmem:[%s7 + $0x78] sm:$0xff]
  %v630 = vld [vmem:[%s8] sm:$0x1]
  %v631 = vld [vmem:[%s9] sm:$0xff]
  %v632 = vld [vmem:[%s9 + $0x8] sm:$0xff]
  %v633 = vld [vmem:[%s9 + $0x10] sm:$0xff]
  %v634 = vld [vmem:[%s9 + $0x18] sm:$0xff]
  %v635 = vld [vmem:[%s9 + $0x20] sm:$0xff]
  %v636 = vld [vmem:[%s9 + $0x28] sm:$0xff]
  %v637 = vld [vmem:[%s9 + $0x30] sm:$0xff]
  %v638 = vld [vmem:[%s9 + $0x38] sm:$0xff]
  %v639 = vld [vmem:[%s9 + $0x40] sm:$0xff]
  %v640 = vld [vmem:[%s9 + $0x48] sm:$0xff]
  %v641 = vld [vmem:[%s9 + $0x50] sm:$0xff]
  %v642 = vld [vmem:[%s9 + $0x58] sm:$0xff]
  %v643 = vld [vmem:[%s9 + $0x60] sm:$0xff]
  %v644 = vld [vmem:[%s9 + $0x68] sm:$0xff]
  %v645 = vld [vmem:[%s9 + $0x70] sm:$0xff]
  %v646 = vld [vmem:[%s9 + $0x78] sm:$0xff]
  %v647 = vld [vmem:[%s10] sm:$0x1]
  %648 = vmatprep.subr.mxu0 0.0
  %649 = vmatpush1.msra.mxu0 %v598
  %650 = vmatprep.subr.mxu0 0.0
  %651 = vmatpush1.msra.mxu0 %v599
  %652 = vmatprep.subr.mxu0 0.0
  %653 = vmatpush1.msra.mxu0 %v600
  %654 = vmatprep.subr.mxu0 0.0
  %655 = vmatpush1.msra.mxu0 %v601
  %656 = vmatprep.subr.mxu0 0.0
  %657 = vmatpush1.msra.mxu0 %v602
  %658 = vmatprep.subr.mxu0 0.0
  %659 = vmatpush1.msra.mxu0 %v603
  %660 = vmatprep.subr.mxu0 0.0
  %661 = vmatpush1.msra.mxu0 %v604
  %662 = vmatprep.subr.mxu0 0.0
  %663 = vmatpush1.msra.mxu0 %v605
  %664 = vmatprep.subr.mxu0 0.0
  %665 = vmatpush1.msra.mxu0 %v606
  %666 = vmatprep.subr.mxu0 0.0
  %667 = vmatpush1.msra.mxu0 %v607
  %668 = vmatprep.subr.mxu0 0.0
  %669 = vmatpush1.msra.mxu0 %v608
  %670 = vmatprep.subr.mxu0 0.0
  %671 = vmatpush1.msra.mxu0 %v609
  %672 = vmatprep.subr.mxu0 0.0
  %673 = vmatpush1.msra.mxu0 %v610
  %674 = vmatprep.subr.mxu0 0.0
  %675 = vmatpush1.msra.mxu0 %v611
  %676 = vmatprep.subr.mxu0 0.0
  %677 = vmatpush1.msra.mxu0 %v612
  %678 = vmatprep.subr.mxu0 0.0
  %679 = vmatpush1.msra.mxu0 %v613
  %680 = vmatprep.subr.mxu0 0.0
  %681 = vmatpush1.msra.mxu0 0.0
  %682 = vmatprep.subr.mxu0 0.0
  %683 = vmatpush1.msra.mxu0 0.0
  %684 = vmatprep.subr.mxu0 0.0
  %685 = vmatpush1.msra.mxu0 0.0
  %686 = vmatprep.subr.mxu0 0.0
  %687 = vmatpush1.msra.mxu0 0.0
  %688 = vmatprep.subr.mxu0 0.0
  %689 = vmatpush1.msra.mxu0 0.0
  %690 = vmatprep.subr.mxu0 0.0
  %691 = vmatpush1.msra.mxu0 0.0
  %692 = vmatprep.subr.mxu0 0.0
  %693 = vmatpush1.msra.mxu0 0.0
  %694 = vmatprep.subr.mxu0 0.0
  %695 = vmatpush1.msra.mxu0 0.0
  %696 = vmatprep.subr.mxu0 0.0
  %697 = vmatpush1.msra.mxu0 0.0
  %698 = vmatprep.subr.mxu0 0.0
  %699 = vmatpush1.msra.mxu0 0.0
  %700 = vmatprep.subr.mxu0 0.0
  %701 = vmatpush1.msra.mxu0 0.0
  %702 = vmatprep.subr.mxu0 0.0
  %703 = vmatpush1.msra.mxu0 0.0
  %704 = vmatprep.subr.mxu0 0.0
  %705 = vmatpush1.msra.mxu0 0.0
  %706 = vmatprep.subr.mxu0 0.0
  %707 = vmatpush1.msra.mxu0 0.0
  %708 = vmatprep.subr.mxu0 0.0
  %709 = vmatpush1.msra.mxu0 0.0
  %710 = vmatprep.subr.mxu0 0.0
  %711 = vmatpush1.msra.mxu0 0.0
  %712 = vmatprep.mubr.f32.mxu0 0.0
  %713 = vmatmul.mubr.f32.gmra.mrb[0].mxu0 %v68
  %v714 = vpop.f32.mrb[0].mxu0
  %v715 = vadd.f32 0.0, %v714
  %v716 = vpop.f32.mrb[0].mxu0
  %717 = vmatprep.mubr.f32.mxu0 0.0
  %718 = vmatmul.mubr.f32.gmra.mrb[0].mxu0 %v69
  %v719 = vpop.f32.mrb[0].mxu0
  %v720 = vadd.f32 0.0, %v719
  %v721 = vpop.f32.mrb[0].mxu0
  %722 = vmatprep.mubr.f32.mxu0 0.0
  %723 = vmatmul.mubr.f32.gmra.mrb[0].mxu0 %v70
  %v724 = vpop.f32.mrb[0].mxu0
  %v725 = vadd.f32 0.0, %v724
  %v726 = vpop.f32.mrb[0].mxu0
  %727 = vmatprep.mubr.f32.mxu0 0.0
  %728 = vmatmul.mubr.f32.gmra.mrb[0].mxu0 %v71
  %v729 = vpop.f32.mrb[0].mxu0
  %v730 = vadd.f32 0.0, %v729
  %v731 = vpop.f32.mrb[0].mxu0
  %732 = vmatprep.mubr.f32.mxu0 0.0
  %733 = vmatmul.mubr.f32.gmra.mrb[0].mxu0 %v72
  %v734 = vpop.f32.mrb[0].mxu0
  %v735 = vadd.f32 0.0, %v734
  %v736 = vpop.f32.mrb[0].mxu0
  %737 = vmatprep.mubr.f32.mxu0 0.0
  %738 = vmatmul.mubr.f32.gmra.mrb[0].mxu0 %v73
  %v739 = vpop.f32.mrb[0].mxu0
  %v740 = vadd.f32 0.0, %v739
  %v741 = vpop.f32.mrb[0].mxu0
  %742 = vmatprep.mubr.f32.mxu0 0.0
  %743 = vmatmul.mubr.f32.gmra.mrb[0].mxu0 %v74
  %v744 = vpop.f32.mrb[0].mxu0
  %v745 = vadd.f32 0.0, %v744
  %v746 = vpop.f32.mrb[0].mxu0
  %747 = vmatprep.mubr.f32.mxu0 0.0
  %748 = vmatmul.mubr.f32.gmra.mrb[0].mxu0 %v75
  %v749 = vpop.f32.mrb[0].mxu0
  %v750 = vadd.f32 0.0, %v749
  %v751 = vpop.f32.mrb[0].mxu0
  %752 = vmatprep.mubr.f32.mxu0 0.0
  %753 = vmatmul.mubr.f32.gmra.mrb[0].mxu0 %v76
  %v754 = vpop.f32.mrb[0].mxu0
  %v755 = vadd.f32 0.0, %v754
  %v756 = vpop.f32.mrb[0].mxu0
  %757 = vmatprep.mubr.f32.mxu0 0.0
  %758 = vmatmul.mubr.f32.gmra.mrb[0].mxu0 %v77
  %v759 = vpop.f32.mrb[0].mxu0
  %v760 = vadd.f32 0.0, %v759
  %v761 = vpop.f32.mrb[0].mxu0
  %762 = vmatprep.mubr.f32.mxu0 0.0
  %763 = vmatmul.mubr.f32.gmra.mrb[0].mxu0 %v78
  %v764 = vpop.f32.mrb[0].mxu0
  %v765 = vadd.f32 0.0, %v764
  %v766 = vpop.f32.mrb[0].mxu0
  %767 = vmatprep.mubr.f32.mxu0 0.0
  %768 = vmatmul.mubr.f32.gmra.mrb[0].mxu0 %v79
  %v769 = vpop.f32.mrb[0].mxu0
  %v770 = vadd.f32 0.0, %v769
  %v771 = vpop.f32.mrb[0].mxu0
  %772 = vmatprep.mubr.f32.mxu0 0.0
  %773 = vmatmul.mubr.f32.gmra.mrb[0].mxu0 %v80
  %v774 = vpop.f32.mrb[0].mxu0
  %v775 = vadd.f32 0.0, %v774
  %v776 = vpop.f32.mrb[0].mxu0
  %777 = vmatprep.mubr.f32.mxu0 0.0
  %778 = vmatmul.mubr.f32.gmra.mrb[0].mxu0 %v81
  %v779 = vpop.f32.mrb[0].mxu0
  %v780 = vadd.f32 0.0, %v779
  %v781 = vpop.f32.mrb[0].mxu0
  %782 = vmatprep.mubr.f32.mxu0 0.0
  %783 = vmatmul.mubr.f32.gmra.mrb[0].mxu0 %v82
  %v784 = vpop.f32.mrb[0].mxu0
  %v785 = vadd.f32 0.0, %v784
  %v786 = vpop.f32.mrb[0].mxu0
  %787 = vmatprep.mubr.f32.mxu0 0.0
  %788 = vmatmul.mubr.f32.gmra.mrb[0].mxu0 %v83
  %v789 = vpop.f32.mrb[0].mxu0
  %v790 = vadd.f32 0.0, %v789
  %v791 = vpop.f32.mrb[0].mxu0
  %792 = vdwg.mxu0
  %v794 = vlaneseq
  %v795 = vshrl.u32 %v794, 7
  %v796 = vsub.s32 0, %v795
  %v797 = vrot.slane %v630, %v796
  %799 = vmatprep.subr.mxu0 0.0
  %800 = vmatpush1.msra.mxu0 %v614
  %801 = vmatprep.subr.mxu0 0.0
  %802 = vmatpush1.msra.mxu0 %v615
  %803 = vmatprep.subr.mxu0 0.0
  %804 = vmatpush1.msra.mxu0 %v616
  %805 = vmatprep.subr.mxu0 0.0
  %806 = vmatpush1.msra.mxu0 %v617
  %807 = vmatprep.subr.mxu0 0.0
  %808 = vmatpush1.msra.mxu0 %v618
  %809 = vmatprep.subr.mxu0 0.0
  %810 = vmatpush1.msra.mxu0 %v619
  %811 = vmatprep.subr.mxu0 0.0
  %812 = vmatpush1.msra.mxu0 %v620
  %813 = vmatprep.subr.mxu0 0.0
  %814 = vmatpush1.msra.mxu0 %v621
  %815 = vmatprep.subr.mxu0 0.0
  %816 = vmatpush1.msra.mxu0 %v622
  %817 = vmatprep.subr.mxu0 0.0
  %818 = vmatpush1.msra.mxu0 %v623
  %819 = vmatprep.subr.mxu0 0.0
  %820 = vmatpush1.msra.mxu0 %v624
  %821 = vmatprep.subr.mxu0 0.0
  %822 = vmatpush1.msra.mxu0 %v625
  %823 = vmatprep.subr.mxu0 0.0
  %824 = vmatpush1.msra.mxu0 %v626
  %825 = vmatprep.subr.mxu0 0.0
  %826 = vmatpush1.msra.mxu0 %v627
  %827 = vmatprep.subr.mxu0 0.0
  %828 = vmatpush1.msra.mxu0 %v628
  %829 = vmatprep.subr.mxu0 0.0
  %830 = vmatpush1.msra.mxu0 %v629
  %831 = vmatprep.subr.mxu0 0.0
  %832 = vmatpush1.msra.mxu0 0.0
  %833 = vmatprep.subr.mxu0 0.0
  %834 = vmatpush1.msra.mxu0 0.0
  %835 = vmatprep.subr.mxu0 0.0
  %836 = vmatpush1.msra.mxu0 0.0
  %837 = vmatprep.subr.mxu0 0.0
  %838 = vmatpush1.msra.mxu0 0.0
  %839 = vmatprep.subr.mxu0 0.0
  %840 = vmatpush1.msra.mxu0 0.0
  %841 = vmatprep.subr.mxu0 0.0
  %842 = vmatpush1.msra.mxu0 0.0
  %843 = vmatprep.subr.mxu0 0.0
  %844 = vmatpush1.msra.mxu0 0.0
  %845 = vmatprep.subr.mxu0 0.0
  %846 = vmatpush1.msra.mxu0 0.0
  %847 = vmatprep.subr.mxu0 0.0
  %848 = vmatpush1.msra.mxu0 0.0
  %849 = vmatprep.subr.mxu0 0.0
  %850 = vmatpush1.msra.mxu0 0.0
  %851 = vmatprep.subr.mxu0 0.0
  %852 = vmatpush1.msra.mxu0 0.0
  %853 = vmatprep.subr.mxu0 0.0
  %854 = vmatpush1.msra.mxu0 0.0
  %855 = vmatprep.subr.mxu0 0.0
  %856 = vmatpush1.msra.mxu0 0.0
  %857 = vmatprep.subr.mxu0 0.0
  %858 = vmatpush1.msra.mxu0 0.0
  %859 = vmatprep.subr.mxu0 0.0
  %860 = vmatpush1.msra.mxu0 0.0
  %861 = vmatprep.subr.mxu0 0.0
  %862 = vmatpush1.msra.mxu0 0.0
  %863 = vmatprep.mubr.f32.mxu0 0.0
  %864 = vmatmul.mubr.f32.gmra.mrb[0].mxu0 %v715
  %v865 = vpop.f32.mrb[0].mxu0
  %v866 = vadd.f32 %v797, %v865
  %v867 = vpop.f32.mrb[0].mxu0
  %868 = vmatprep.mubr.f32.mxu0 0.0
  %869 = vmatmul.mubr.f32.gmra.mrb[0].mxu0 %v720
  %v870 = vpop.f32.mrb[0].mxu0
  %v871 = vadd.f32 %v797, %v870
  %v872 = vpop.f32.mrb[0].mxu0
  %873 = vmatprep.mubr.f32.mxu0 0.0
  %874 = vmatmul.mubr.f32.gmra.mrb[0].mxu0 %v725
  %v875 = vpop.f32.mrb[0].mxu0
  %v876 = vadd.f32 %v797, %v875
  %v877 = vpop.f32.mrb[0].mxu0
  %878 = vmatprep.mubr.f32.mxu0 0.0
  %879 = vmatmul.mubr.f32.gmra.mrb[0].mxu0 %v730
  %v880 = vpop.f32.mrb[0].mxu0
  %v881 = vadd.f32 %v797, %v880
  %v882 = vpop.f32.mrb[0].mxu0
  %883 = vmatprep.mubr.f32.mxu0 0.0
  %884 = vmatmul.mubr.f32.gmra.mrb[0].mxu0 %v735
  %v885 = vpop.f32.mrb[0].mxu0
  %v886 = vadd.f32 %v797, %v885
  %v887 = vpop.f32.mrb[0].mxu0
  %888 = vmatprep.mubr.f32.mxu0 0.0
  %889 = vmatmul.mubr.f32.gmra.mrb[0].mxu0 %v740
  %v890 = vpop.f32.mrb[0].mxu0
  %v891 = vadd.f32 %v797, %v890
  %v892 = vpop.f32.mrb[0].mxu0
  %893 = vmatprep.mubr.f32.mxu0 0.0
  %894 = vmatmul.mubr.f32.gmra.mrb[0].mxu0 %v745
  %v895 = vpop.f32.mrb[0].mxu0
  %v896 = vadd.f32 %v797, %v895
  %v897 = vpop.f32.mrb[0].mxu0
  %898 = vmatprep.mubr.f32.mxu0 0.0
  %899 = vmatmul.mubr.f32.gmra.mrb[0].mxu0 %v750
  %v900 = vpop.f32.mrb[0].mxu0
  %v901 = vadd.f32 %v797, %v900
  %v902 = vpop.f32.mrb[0].mxu0
  %903 = vmatprep.mubr.f32.mxu0 0.0
  %904 = vmatmul.mubr.f32.gmra.mrb[0].mxu0 %v755
  %v905 = vpop.f32.mrb[0].mxu0
  %v906 = vadd.f32 %v797, %v905
  %v907 = vpop.f32.mrb[0].mxu0
  %908 = vmatprep.mubr.f32.mxu0 0.0
  %909 = vmatmul.mubr.f32.gmra.mrb[0].mxu0 %v760
  %v910 = vpop.f32.mrb[0].mxu0
  %v911 = vadd.f32 %v797, %v910
  %v912 = vpop.f32.mrb[0].mxu0
  %913 = vmatprep.mubr.f32.mxu0 0.0
  %914 = vmatmul.mubr.f32.gmra.mrb[0].mxu0 %v765
  %v915 = vpop.f32.mrb[0].mxu0
  %v916 = vadd.f32 %v797, %v915
  %v917 = vpop.f32.mrb[0].mxu0
  %918 = vmatprep.mubr.f32.mxu0 0.0
  %919 = vmatmul.mubr.f32.gmra.mrb[0].mxu0 %v770
  %v920 = vpop.f32.mrb[0].mxu0
  %v921 = vadd.f32 %v797, %v920
  %v922 = vpop.f32.mrb[0].mxu0
  %923 = vmatprep.mubr.f32.mxu0 0.0
  %924 = vmatmul.mubr.f32.gmra.mrb[0].mxu0 %v775
  %v925 = vpop.f32.mrb[0].mxu0
  %v926 = vadd.f32 %v797, %v925
  %v927 = vpop.f32.mrb[0].mxu0
  %928 = vmatprep.mubr.f32.mxu0 0.0
  %929 = vmatmul.mubr.f32.gmra.mrb[0].mxu0 %v780
  %v930 = vpop.f32.mrb[0].mxu0
  %v931 = vadd.f32 %v797, %v930
  %v932 = vpop.f32.mrb[0].mxu0
  %933 = vmatprep.mubr.f32.mxu0 0.0
  %934 = vmatmul.mubr.f32.gmra.mrb[0].mxu0 %v785
  %v935 = vpop.f32.mrb[0].mxu0
  %v936 = vadd.f32 %v797, %v935
  %v937 = vpop.f32.mrb[0].mxu0
  %938 = vmatprep.mubr.f32.mxu0 0.0
  %939 = vmatmul.mubr.f32.gmra.mrb[0].mxu0 %v790
  %v940 = vpop.f32.mrb[0].mxu0
  %v941 = vadd.f32 %v797, %v940
  %v942 = vpop.f32.mrb[0].mxu0
  %943 = vdwg.mxu0
  %v944 = vmax.f32 %v866, 0.0
  %v945 = vmax.f32 %v871, 0.0
  %v946 = vmax.f32 %v876, 0.0
  %v947 = vmax.f32 %v881, 0.0
  %v948 = vmax.f32 %v886, 0.0
  %v949 = vmax.f32 %v891, 0.0
  %v950 = vmax.f32 %v896, 0.0
  %v951 = vmax.f32 %v901, 0.0
  %v952 = vmax.f32 %v906, 0.0
  %v953 = vmax.f32 %v911, 0.0
  %v954 = vmax.f32 %v916, 0.0
  %v955 = vmax.f32 %v921, 0.0
  %v956 = vmax.f32 %v926, 0.0
  %v957 = vmax.f32 %v931, 0.0
  %v958 = vmax.f32 %v936, 0.0
  %v959 = vmax.f32 %v941, 0.0
  %v961 = vlaneseq
  %v962 = vshrl.u32 %v961, 7
  %v963 = vsub.s32 0, %v962
  %v964 = vrot.slane %v647, %v963
  %966 = vmatprep.subr.mxu0 0.0
  %967 = vmatpush1.msra.mxu0 %v631
  %968 = vmatprep.subr.mxu0 0.0
  %969 = vmatpush1.msra.mxu0 %v632
  %970 = vmatprep.subr.mxu0 0.0
  %971 = vmatpush1.msra.mxu0 %v633
  %972 = vmatprep.subr.mxu0 0.0
  %973 = vmatpush1.msra.mxu0 %v634
  %974 = vmatprep.subr.mxu0 0.0
  %975 = vmatpush1.msra.mxu0 %v635
  %976 = vmatprep.subr.mxu0 0.0
  %977 = vmatpush1.msra.mxu0 %v636
  %978 = vmatprep.subr.mxu0 0.0
  %979 = vmatpush1.msra.mxu0 %v637
  %980 = vmatprep.subr.mxu0 0.0
  %981 = vmatpush1.msra.mxu0 %v638
  %982 = vmatprep.subr.mxu0 0.0
  %983 = vmatpush1.msra.mxu0 %v639
  %984 = vmatprep.subr.mxu0 0.0
  %985 = vmatpush1.msra.mxu0 %v640
  %986 = vmatprep.subr.mxu0 0.0
  %987 = vmatpush1.msra.mxu0 %v641
  %988 = vmatprep.subr.mxu0 0.0
  %989 = vmatpush1.msra.mxu0 %v642
  %990 = vmatprep.subr.mxu0 0.0
  %991 = vmatpush1.msra.mxu0 %v643
  %992 = vmatprep.subr.mxu0 0.0
  %993 = vmatpush1.msra.mxu0 %v644
  %994 = vmatprep.subr.mxu0 0.0
  %995 = vmatpush1.msra.mxu0 %v645
  %996 = vmatprep.subr.mxu0 0.0
  %997 = vmatpush1.msra.mxu0 %v646
  %998 = vmatprep.subr.mxu0 0.0
  %999 = vmatpush1.msra.mxu0 0.0
  %1000 = vmatprep.subr.mxu0 0.0
  %1001 = vmatpush1.msra.mxu0 0.0
  %1002 = vmatprep.subr.mxu0 0.0
  %1003 = vmatpush1.msra.mxu0 0.0
  %1004 = vmatprep.subr.mxu0 0.0
  %1005 = vmatpush1.msra.mxu0 0.0
  %1006 = vmatprep.subr.mxu0 0.0
  %1007 = vmatpush1.msra.mxu0 0.0
  %1008 = vmatprep.subr.mxu0 0.0
  %1009 = vmatpush1.msra.mxu0 0.0
  %1010 = vmatprep.subr.mxu0 0.0
  %1011 = vmatpush1.msra.mxu0 0.0
  %1012 = vmatprep.subr.mxu0 0.0
  %1013 = vmatpush1.msra.mxu0 0.0
  %1014 = vmatprep.subr.mxu0 0.0
  %1015 = vmatpush1.msra.mxu0 0.0
  %1016 = vmatprep.subr.mxu0 0.0
  %1017 = vmatpush1.msra.mxu0 0.0
  %1018 = vmatprep.subr.mxu0 0.0
  %1019 = vmatpush1.msra.mxu0 0.0
  %1020 = vmatprep.subr.mxu0 0.0
  %1021 = vmatpush1.msra.mxu0 0.0
  %1022 = vmatprep.subr.mxu0 0.0
  %1023 = vmatpush1.msra.mxu0 0.0
  %1024 = vmatprep.subr.mxu0 0.0
  %1025 = vmatpush1.msra.mxu0 0.0
  %1026 = vmatprep.subr.mxu0 0.0
  %1027 = vmatpush1.msra.mxu0 0.0
  %1028 = vmatprep.subr.mxu0 0.0
  %1029 = vmatpush1.msra.mxu0 0.0
  %1030 = vmatprep.mubr.f32.mxu0 0.0
  %1031 = vmatmul.mubr.f32.gmra.mrb[0].mxu0 %v944
  %v1032 = vpop.f32.mrb[0].mxu0
  %v1033 = vadd.f32 %v964, %v1032
  %v1034 = vpop.f32.mrb[0].mxu0
  %1035 = vmatprep.mubr.f32.mxu0 0.0
  %1036 = vmatmul.mubr.f32.gmra.mrb[0].mxu0 %v945
  %v1037 = vpop.f32.mrb[0].mxu0
  %v1038 = vadd.f32 %v964, %v1037
  %v1039 = vpop.f32.mrb[0].mxu0
  %1040 = vmatprep.mubr.f32.mxu0 0.0
  %1041 = vmatmul.mubr.f32.gmra.mrb[0].mxu0 %v946
  %v1042 = vpop.f32.mrb[0].mxu0
  %v1043 = vadd.f32 %v964, %v1042
  %v1044 = vpop.f32.mrb[0].mxu0
  %1045 = vmatprep.mubr.f32.mxu0 0.0
  %1046 = vmatmul.mubr.f32.gmra.mrb[0].mxu0 %v947
  %v1047 = vpop.f32.mrb[0].mxu0
  %v1048 = vadd.f32 %v964, %v1047
  %v1049 = vpop.f32.mrb[0].mxu0
  %1050 = vmatprep.mubr.f32.mxu0 0.0
  %1051 = vmatmul.mubr.f32.gmra.mrb[0].mxu0 %v948
  %v1052 = vpop.f32.mrb[0].mxu0
  %v1053 = vadd.f32 %v964, %v1052
  %v1054 = vpop.f32.mrb[0].mxu0
  %1055 = vmatprep.mubr.f32.mxu0 0.0
  %1056 = vmatmul.mubr.f32.gmra.mrb[0].mxu0 %v949
  %v1057 = vpop.f32.mrb[0].mxu0
  %v1058 = vadd.f32 %v964, %v1057
  %v1059 = vpop.f32.mrb[0].mxu0
  %1060 = vmatprep.mubr.f32.mxu0 0.0
  %1061 = vmatmul.mubr.f32.gmra.mrb[0].mxu0 %v950
  %v1062 = vpop.f32.mrb[0].mxu0
  %v1063 = vadd.f32 %v964, %v1062
  %v1064 = vpop.f32.mrb[0].mxu0
  %1065 = vmatprep.mubr.f32.mxu0 0.0
  %1066 = vmatmul.mubr.f32.gmra.mrb[0].mxu0 %v951
  %v1067 = vpop.f32.mrb[0].mxu0
  %v1068 = vadd.f32 %v964, %v1067
  %v1069 = vpop.f32.mrb[0].mxu0
  %1070 = vmatprep.mubr.f32.mxu0 0.0
  %1071 = vmatmul.mubr.f32.gmra.mrb[0].mxu0 %v952
  %v1072 = vpop.f32.mrb[0].mxu0
  %v1073 = vadd.f32 %v964, %v1072
  %v1074 = vpop.f32.mrb[0].mxu0
  %1075 = vmatprep.mubr.f32.mxu0 0.0
  %1076 = vmatmul.mubr.f32.gmra.mrb[0].mxu0 %v953
  %v1077 = vpop.f32.mrb[0].mxu0
  %v1078 = vadd.f32 %v964, %v1077
  %v1079 = vpop.f32.mrb[0].mxu0
  %1080 = vmatprep.mubr.f32.mxu0 0.0
  %1081 = vmatmul.mubr.f32.gmra.mrb[0].mxu0 %v954
  %v1082 = vpop.f32.mrb[0].mxu0
  %v1083 = vadd.f32 %v964, %v1082
  %v1084 = vpop.f32.mrb[0].mxu0
  %1085 = vmatprep.mubr.f32.mxu0 0.0
  %1086 = vmatmul.mubr.f32.gmra.mrb[0].mxu0 %v955
  %v1087 = vpop.f32.mrb[0].mxu0
  %v1088 = vadd.f32 %v964, %v1087
  %v1089 = vpop.f32.mrb[0].mxu0
  %1090 = vmatprep.mubr.f32.mxu0 0.0
  %1091 = vmatmul.mubr.f32.gmra.mrb[0].mxu0 %v956
  %v1092 = vpop.f32.mrb[0].mxu0
  %v1093 = vadd.f32 %v964, %v1092
  %v1094 = vpop.f32.mrb[0].mxu0
  %1095 = vmatprep.mubr.f32.mxu0 0.0
  %1096 = vmatmul.mubr.f32.gmra.mrb[0].mxu0 %v957
  %v1097 = vpop.f32.mrb[0].mxu0
  %v1098 = vadd.f32 %v964, %v1097
  %v1099 = vpop.f32.mrb[0].mxu0
  %1100 = vmatprep.mubr.f32.mxu0 0.0
  %1101 = vmatmul.mubr.f32.gmra.mrb[0].mxu0 %v958
  %v1102 = vpop.f32.mrb[0].mxu0
  %v1103 = vadd.f32 %v964, %v1102
  %v1104 = vpop.f32.mrb[0].mxu0
  %1105 = vmatprep.mubr.f32.mxu0 0.0
  %1106 = vmatmul.mubr.f32.gmra.mrb[0].mxu0 %v959
  %v1107 = vpop.f32.mrb[0].mxu0
  %v1108 = vadd.f32 %v964, %v1107
  %v1109 = vpop.f32.mrb[0].mxu0
  %1110 = vdwg.mxu0
  %v1111 = vmax.f32 %v1033, 0.0
  %v1112 = vmax.f32 %v1038, 0.0
  %v1113 = vmax.f32 %v1043, 0.0
  %v1114 = vmax.f32 %v1048, 0.0
  %v1115 = vmax.f32 %v1053, 0.0
  %v1116 = vmax.f32 %v1058, 0.0
  %v1117 = vmax.f32 %v1063, 0.0
  %v1118 = vmax.f32 %v1068, 0.0
  %v1119 = vmax.f32 %v1073, 0.0
  %v1120 = vmax.f32 %v1078, 0.0
  %v1121 = vmax.f32 %v1083, 0.0
  %v1122 = vmax.f32 %v1088, 0.0
  %v1123 = vmax.f32 %v1093, 0.0
  %v1124 = vmax.f32 %v1098, 0.0
  %v1125 = vmax.f32 %v1103, 0.0
  %v1126 = vmax.f32 %v1108, 0.0
  %v1127 = vld [vmem:[%s11] sm:$0xff]
  %v1128 = vld [vmem:[%s11 + $0x8] sm:$0xff]
  %v1129 = vld [vmem:[%s11 + $0x10] sm:$0xff]
  %v1130 = vld [vmem:[%s11 + $0x18] sm:$0xff]
  %v1131 = vld [vmem:[%s11 + $0x20] sm:$0xff]
  %v1132 = vld [vmem:[%s11 + $0x28] sm:$0xff]
  %v1133 = vld [vmem:[%s11 + $0x30] sm:$0xff]
  %v1134 = vld [vmem:[%s11 + $0x38] sm:$0xff]
  %v1135 = vld [vmem:[%s11 + $0x40] sm:$0xff]
  %v1136 = vld [vmem:[%s11 + $0x48] sm:$0xff]
  %v1137 = vld [vmem:[%s11 + $0x50] sm:$0xff]
  %v1138 = vld [vmem:[%s11 + $0x58] sm:$0xff]
  %v1139 = vld [vmem:[%s11 + $0x60] sm:$0xff]
  %v1140 = vld [vmem:[%s11 + $0x68] sm:$0xff]
  %v1141 = vld [vmem:[%s11 + $0x70] sm:$0xff]
  %v1142 = vld [vmem:[%s11 + $0x78] sm:$0xff]
  %v1143 = vld [vmem:[%s12] sm:$0x1]
  %v1144 = vld [vmem:[%s13] sm:$0xff]
  %v1145 = vld [vmem:[%s13 + $0x8] sm:$0xff]
  %v1146 = vld [vmem:[%s13 + $0x10] sm:$0xff]
  %v1147 = vld [vmem:[%s13 + $0x18] sm:$0xff]
  %v1148 = vld [vmem:[%s13 + $0x20] sm:$0xff]
  %v1149 = vld [vmem:[%s13 + $0x28] sm:$0xff]
  %v1150 = vld [vmem:[%s13 + $0x30] sm:$0xff]
  %v1151 = vld [vmem:[%s13 + $0x38] sm:$0xff]
  %v1152 = vld [vmem:[%s13 + $0x40] sm:$0xff]
  %v1153 = vld [vmem:[%s13 + $0x48] sm:$0xff]
  %v1154 = vld [vmem:[%s13 + $0x50] sm:$0xff]
  %v1155 = vld [vmem:[%s13 + $0x58] sm:$0xff]
  %v1156 = vld [vmem:[%s13 + $0x60] sm:$0xff]
  %v1157 = vld [vmem:[%s13 + $0x68] sm:$0xff]
  %v1158 = vld [vmem:[%s13 + $0x70] sm:$0xff]
  %v1159 = vld [vmem:[%s13 + $0x78] sm:$0xff]
  %v1160 = vld [vmem:[%s14] sm:$0x1]
  %1161 = vmatprep.subr.mxu0 0.0
  %1162 = vmatpush1.msra.mxu0 %v1111
  %1163 = vmatprep.subr.mxu0 0.0
  %1164 = vmatpush1.msra.mxu0 %v1112
  %1165 = vmatprep.subr.mxu0 0.0
  %1166 = vmatpush1.msra.mxu0 %v1113
  %1167 = vmatprep.subr.mxu0 0.0
  %1168 = vmatpush1.msra.mxu0 %v1114
  %1169 = vmatprep.subr.mxu0 0.0
  %1170 = vmatpush1.msra.mxu0 %v1115
  %1171 = vmatprep.subr.mxu0 0.0
  %1172 = vmatpush1.msra.mxu0 %v1116
  %1173 = vmatprep.subr.mxu0 0.0
  %1174 = vmatpush1.msra.mxu0 %v1117
  %1175 = vmatprep.subr.mxu0 0.0
  %1176 = vmatpush1.msra.mxu0 %v1118
  %1177 = vmatprep.subr.mxu0 0.0
  %1178 = vmatpush1.msra.mxu0 %v1119
  %1179 = vmatprep.subr.mxu0 0.0
  %1180 = vmatpush1.msra.mxu0 %v1120
  %1181 = vmatprep.subr.mxu0 0.0
  %1182 = vmatpush1.msra.mxu0 %v1121
  %1183 = vmatprep.subr.mxu0 0.0
  %1184 = vmatpush1.msra.mxu0 %v1122
  %1185 = vmatprep.subr.mxu0 0.0
  %1186 = vmatpush1.msra.mxu0 %v1123
  %1187 = vmatprep.subr.mxu0 0.0
  %1188 = vmatpush1.msra.mxu0 %v1124
  %1189 = vmatprep.subr.mxu0 0.0
  %1190 = vmatpush1.msra.mxu0 %v1125
  %1191 = vmatprep.subr.mxu0 0.0
  %1192 = vmatpush1.msra.mxu0 %v1126
  %1193 = vmatprep.subr.mxu0 0.0
  %1194 = vmatpush1.msra.mxu0 0.0
  %1195 = vmatprep.subr.mxu0 0.0
  %1196 = vmatpush1.msra.mxu0 0.0
  %1197 = vmatprep.subr.mxu0 0.0
  %1198 = vmatpush1.msra.mxu0 0.0
  %1199 = vmatprep.subr.mxu0 0.0
  %1200 = vmatpush1.msra.mxu0 0.0
  %1201 = vmatprep.subr.mxu0 0.0
  %1202 = vmatpush1.msra.mxu0 0.0
  %1203 = vmatprep.subr.mxu0 0.0
  %1204 = vmatpush1.msra.mxu0 0.0
  %1205 = vmatprep.subr.mxu0 0.0
  %1206 = vmatpush1.msra.mxu0 0.0
  %1207 = vmatprep.subr.mxu0 0.0
  %1208 = vmatpush1.msra.mxu0 0.0
  %1209 = vmatprep.subr.mxu0 0.0
  %1210 = vmatpush1.msra.mxu0 0.0
  %1211 = vmatprep.subr.mxu0 0.0
  %1212 = vmatpush1.msra.mxu0 0.0
  %1213 = vmatprep.subr.mxu0 0.0
  %1214 = vmatpush1.msra.mxu0 0.0
  %1215 = vmatprep.subr.mxu0 0.0
  %1216 = vmatpush1.msra.mxu0 0.0
  %1217 = vmatprep.subr.mxu0 0.0
  %1218 = vmatpush1.msra.mxu0 0.0
  %1219 = vmatprep.subr.mxu0 0.0
  %1220 = vmatpush1.msra.mxu0 0.0
  %1221 = vmatprep.subr.mxu0 0.0
  %1222 = vmatpush1.msra.mxu0 0.0
  %1223 = vmatprep.subr.mxu0 0.0
  %1224 = vmatpush1.msra.mxu0 0.0
  %1225 = vmatprep.mubr.f32.mxu0 0.0
  %1226 = vmatmul.mubr.f32.gmra.mrb[0].mxu0 %v68
  %v1227 = vpop.f32.mrb[0].mxu0
  %v1228 = vadd.f32 0.0, %v1227
  %v1229 = vpop.f32.mrb[0].mxu0
  %1230 = vmatprep.mubr.f32.mxu0 0.0
  %1231 = vmatmul.mubr.f32.gmra.mrb[0].mxu0 %v69
  %v1232 = vpop.f32.mrb[0].mxu0
  %v1233 = vadd.f32 0.0, %v1232
  %v1234 = vpop.f32.mrb[0].mxu0
  %1235 = vmatprep.mubr.f32.mxu0 0.0
  %1236 = vmatmul.mubr.f32.gmra.mrb[0].mxu0 %v70
  %v1237 = vpop.f32.mrb[0].mxu0
  %v1238 = vadd.f32 0.0, %v1237
  %v1239 = vpop.f32.mrb[0].mxu0
  %1240 = vmatprep.mubr.f32.mxu0 0.0
  %1241 = vmatmul.mubr.f32.gmra.mrb[0].mxu0 %v71
  %v1242 = vpop.f32.mrb[0].mxu0
  %v1243 = vadd.f32 0.0, %v1242
  %v1244 = vpop.f32.mrb[0].mxu0
  %1245 = vmatprep.mubr.f32.mxu0 0.0
  %1246 = vmatmul.mubr.f32.gmra.mrb[0].mxu0 %v72
  %v1247 = vpop.f32.mrb[0].mxu0
  %v1248 = vadd.f32 0.0, %v1247
  %v1249 = vpop.f32.mrb[0].mxu0
  %1250 = vmatprep.mubr.f32.mxu0 0.0
  %1251 = vmatmul.mubr.f32.gmra.mrb[0].mxu0 %v73
  %v1252 = vpop.f32.mrb[0].mxu0
  %v1253 = vadd.f32 0.0, %v1252
  %v1254 = vpop.f32.mrb[0].mxu0
  %1255 = vmatprep.mubr.f32.mxu0 0.0
  %1256 = vmatmul.mubr.f32.gmra.mrb[0].mxu0 %v74
  %v1257 = vpop.f32.mrb[0].mxu0
  %v1258 = vadd.f32 0.0, %v1257
  %v1259 = vpop.f32.mrb[0].mxu0
  %1260 = vmatprep.mubr.f32.mxu0 0.0
  %1261 = vmatmul.mubr.f32.gmra.mrb[0].mxu0 %v75
  %v1262 = vpop.f32.mrb[0].mxu0
  %v1263 = vadd.f32 0.0, %v1262
  %v1264 = vpop.f32.mrb[0].mxu0
  %1265 = vmatprep.mubr.f32.mxu0 0.0
  %1266 = vmatmul.mubr.f32.gmra.mrb[0].mxu0 %v76
  %v1267 = vpop.f32.mrb[0].mxu0
  %v1268 = vadd.f32 0.0, %v1267
  %v1269 = vpop.f32.mrb[0].mxu0
  %1270 = vmatprep.mubr.f32.mxu0 0.0
  %1271 = vmatmul.mubr.f32.gmra.mrb[0].mxu0 %v77
  %v1272 = vpop.f32.mrb[0].mxu0
  %v1273 = vadd.f32 0.0, %v1272
  %v1274 = vpop.f32.mrb[0].mxu0
  %1275 = vmatprep.mubr.f32.mxu0 0.0
  %1276 = vmatmul.mubr.f32.gmra.mrb[0].mxu0 %v78
  %v1277 = vpop.f32.mrb[0].mxu0
  %v1278 = vadd.f32 0.0, %v1277
  %v1279 = vpop.f32.mrb[0].mxu0
  %1280 = vmatprep.mubr.f32.mxu0 0.0
  %1281 = vmatmul.mubr.f32.gmra.mrb[0].mxu0 %v79
  %v1282 = vpop.f32.mrb[0].mxu0
  %v1283 = vadd.f32 0.0, %v1282
  %v1284 = vpop.f32.mrb[0].mxu0
  %1285 = vmatprep.mubr.f32.mxu0 0.0
  %1286 = vmatmul.mubr.f32.gmra.mrb[0].mxu0 %v80
  %v1287 = vpop.f32.mrb[0].mxu0
  %v1288 = vadd.f32 0.0, %v1287
  %v1289 = vpop.f32.mrb[0].mxu0
  %1290 = vmatprep.mubr.f32.mxu0 0.0
  %1291 = vmatmul.mubr.f32.gmra.mrb[0].mxu0 %v81
  %v1292 = vpop.f32.mrb[0].mxu0
  %v1293 = vadd.f32 0.0, %v1292
  %v1294 = vpop.f32.mrb[0].mxu0
  %1295 = vmatprep.mubr.f32.mxu0 0.0
  %1296 = vmatmul.mubr.f32.gmra.mrb[0].mxu0 %v82
  %v1297 = vpop.f32.mrb[0].mxu0
  %v1298 = vadd.f32 0.0, %v1297
  %v1299 = vpop.f32.mrb[0].mxu0
  %1300 = vmatprep.mubr.f32.mxu0 0.0
  %1301 = vmatmul.mubr.f32.gmra.mrb[0].mxu0 %v83
  %v1302 = vpop.f32.mrb[0].mxu0
  %v1303 = vadd.f32 0.0, %v1302
  %v1304 = vpop.f32.mrb[0].mxu0
  %1305 = vdwg.mxu0
  %v1307 = vlaneseq
  %v1308 = vshrl.u32 %v1307, 7
  %v1309 = vsub.s32 0, %v1308
  %v1310 = vrot.slane %v1143, %v1309
  %1312 = vmatprep.subr.mxu0 0.0
  %1313 = vmatpush1.msra.mxu0 %v1127
  %1314 = vmatprep.subr.mxu0 0.0
  %1315 = vmatpush1.msra.mxu0 %v1128
  %1316 = vmatprep.subr.mxu0 0.0
  %1317 = vmatpush1.msra.mxu0 %v1129
  %1318 = vmatprep.subr.mxu0 0.0
  %1319 = vmatpush1.msra.mxu0 %v1130
  %1320 = vmatprep.subr.mxu0 0.0
  %1321 = vmatpush1.msra.mxu0 %v1131
  %1322 = vmatprep.subr.mxu0 0.0
  %1323 = vmatpush1.msra.mxu0 %v1132
  %1324 = vmatprep.subr.mxu0 0.0
  %1325 = vmatpush1.msra.mxu0 %v1133
  %1326 = vmatprep.subr.mxu0 0.0
  %1327 = vmatpush1.msra.mxu0 %v1134
  %1328 = vmatprep.subr.mxu0 0.0
  %1329 = vmatpush1.msra.mxu0 %v1135
  %1330 = vmatprep.subr.mxu0 0.0
  %1331 = vmatpush1.msra.mxu0 %v1136
  %1332 = vmatprep.subr.mxu0 0.0
  %1333 = vmatpush1.msra.mxu0 %v1137
  %1334 = vmatprep.subr.mxu0 0.0
  %1335 = vmatpush1.msra.mxu0 %v1138
  %1336 = vmatprep.subr.mxu0 0.0
  %1337 = vmatpush1.msra.mxu0 %v1139
  %1338 = vmatprep.subr.mxu0 0.0
  %1339 = vmatpush1.msra.mxu0 %v1140
  %1340 = vmatprep.subr.mxu0 0.0
  %1341 = vmatpush1.msra.mxu0 %v1141
  %1342 = vmatprep.subr.mxu0 0.0
  %1343 = vmatpush1.msra.mxu0 %v1142
  %1344 = vmatprep.subr.mxu0 0.0
  %1345 = vmatpush1.msra.mxu0 0.0
  %1346 = vmatprep.subr.mxu0 0.0
  %1347 = vmatpush1.msra.mxu0 0.0
  %1348 = vmatprep.subr.mxu0 0.0
  %1349 = vmatpush1.msra.mxu0 0.0
  %1350 = vmatprep.subr.mxu0 0.0
  %1351 = vmatpush1.msra.mxu0 0.0
  %1352 = vmatprep.subr.mxu0 0.0
  %1353 = vmatpush1.msra.mxu0 0.0
  %1354 = vmatprep.subr.mxu0 0.0
  %1355 = vmatpush1.msra.mxu0 0.0
  %1356 = vmatprep.subr.mxu0 0.0
  %1357 = vmatpush1.msra.mxu0 0.0
  %1358 = vmatprep.subr.mxu0 0.0
  %1359 = vmatpush1.msra.mxu0 0.0
  %1360 = vmatprep.subr.mxu0 0.0
  %1361 = vmatpush1.msra.mxu0 0.0
  %1362 = vmatprep.subr.mxu0 0.0
  %1363 = vmatpush1.msra.mxu0 0.0
  %1364 = vmatprep.subr.mxu0 0.0
  %1365 = vmatpush1.msra.mxu0 0.0
  %1366 = vmatprep.subr.mxu0 0.0
  %1367 = vmatpush1.msra.mxu0 0.0
  %1368 = vmatprep.subr.mxu0 0.0
  %1369 = vmatpush1.msra.mxu0 0.0
  %1370 = vmatprep.subr.mxu0 0.0
  %1371 = vmatpush1.msra.mxu0 0.0
  %1372 = vmatprep.subr.mxu0 0.0
  %1373 = vmatpush1.msra.mxu0 0.0
  %1374 = vmatprep.subr.mxu0 0.0
  %1375 = vmatpush1.msra.mxu0 0.0
  %1376 = vmatprep.mubr.f32.mxu0 0.0
  %1377 = vmatmul.mubr.f32.gmra.mrb[0].mxu0 %v1228
  %v1378 = vpop.f32.mrb[0].mxu0
  %v1379 = vadd.f32 %v1310, %v1378
  %v1380 = vpop.f32.mrb[0].mxu0
  %1381 = vmatprep.mubr.f32.mxu0 0.0
  %1382 = vmatmul.mubr.f32.gmra.mrb[0].mxu0 %v1233
  %v1383 = vpop.f32.mrb[0].mxu0
  %v1384 = vadd.f32 %v1310, %v1383
  %v1385 = vpop.f32.mrb[0].mxu0
  %1386 = vmatprep.mubr.f32.mxu0 0.0
  %1387 = vmatmul.mubr.f32.gmra.mrb[0].mxu0 %v1238
  %v1388 = vpop.f32.mrb[0].mxu0
  %v1389 = vadd.f32 %v1310, %v1388
  %v1390 = vpop.f32.mrb[0].mxu0
  %1391 = vmatprep.mubr.f32.mxu0 0.0
  %1392 = vmatmul.mubr.f32.gmra.mrb[0].mxu0 %v1243
  %v1393 = vpop.f32.mrb[0].mxu0
  %v1394 = vadd.f32 %v1310, %v1393
  %v1395 = vpop.f32.mrb[0].mxu0
  %1396 = vmatprep.mubr.f32.mxu0 0.0
  %1397 = vmatmul.mubr.f32.gmra.mrb[0].mxu0 %v1248
  %v1398 = vpop.f32.mrb[0].mxu0
  %v1399 = vadd.f32 %v1310, %v1398
  %v1400 = vpop.f32.mrb[0].mxu0
  %1401 = vmatprep.mubr.f32.mxu0 0.0
  %1402 = vmatmul.mubr.f32.gmra.mrb[0].mxu0 %v1253
  %v1403 = vpop.f32.mrb[0].mxu0
  %v1404 = vadd.f32 %v1310, %v1403
  %v1405 = vpop.f32.mrb[0].mxu0
  %1406 = vmatprep.mubr.f32.mxu0 0.0
  %1407 = vmatmul.mubr.f32.gmra.mrb[0].mxu0 %v1258
  %v1408 = vpop.f32.mrb[0].mxu0
  %v1409 = vadd.f32 %v1310, %v1408
  %v1410 = vpop.f32.mrb[0].mxu0
  %1411 = vmatprep.mubr.f32.mxu0 0.0
  %1412 = vmatmul.mubr.f32.gmra.mrb[0].mxu0 %v1263
  %v1413 = vpop.f32.mrb[0].mxu0
  %v1414 = vadd.f32 %v1310, %v1413
  %v1415 = vpop.f32.mrb[0].mxu0
  %1416 = vmatprep.mubr.f32.mxu0 0.0
  %1417 = vmatmul.mubr.f32.gmra.mrb[0].mxu0 %v1268
  %v1418 = vpop.f32.mrb[0].mxu0
  %v1419 = vadd.f32 %v1310, %v1418
  %v1420 = vpop.f32.mrb[0].mxu0
  %1421 = vmatprep.mubr.f32.mxu0 0.0
  %1422 = vmatmul.mubr.f32.gmra.mrb[0].mxu0 %v1273
  %v1423 = vpop.f32.mrb[0].mxu0
  %v1424 = vadd.f32 %v1310, %v1423
  %v1425 = vpop.f32.mrb[0].mxu0
  %1426 = vmatprep.mubr.f32.mxu0 0.0
  %1427 = vmatmul.mubr.f32.gmra.mrb[0].mxu0 %v1278
  %v1428 = vpop.f32.mrb[0].mxu0
  %v1429 = vadd.f32 %v1310, %v1428
  %v1430 = vpop.f32.mrb[0].mxu0
  %1431 = vmatprep.mubr.f32.mxu0 0.0
  %1432 = vmatmul.mubr.f32.gmra.mrb[0].mxu0 %v1283
  %v1433 = vpop.f32.mrb[0].mxu0
  %v1434 = vadd.f32 %v1310, %v1433
  %v1435 = vpop.f32.mrb[0].mxu0
  %1436 = vmatprep.mubr.f32.mxu0 0.0
  %1437 = vmatmul.mubr.f32.gmra.mrb[0].mxu0 %v1288
  %v1438 = vpop.f32.mrb[0].mxu0
  %v1439 = vadd.f32 %v1310, %v1438
  %v1440 = vpop.f32.mrb[0].mxu0
  %1441 = vmatprep.mubr.f32.mxu0 0.0
  %1442 = vmatmul.mubr.f32.gmra.mrb[0].mxu0 %v1293
  %v1443 = vpop.f32.mrb[0].mxu0
  %v1444 = vadd.f32 %v1310, %v1443
  %v1445 = vpop.f32.mrb[0].mxu0
  %1446 = vmatprep.mubr.f32.mxu0 0.0
  %1447 = vmatmul.mubr.f32.gmra.mrb[0].mxu0 %v1298
  %v1448 = vpop.f32.mrb[0].mxu0
  %v1449 = vadd.f32 %v1310, %v1448
  %v1450 = vpop.f32.mrb[0].mxu0
  %1451 = vmatprep.mubr.f32.mxu0 0.0
  %1452 = vmatmul.mubr.f32.gmra.mrb[0].mxu0 %v1303
  %v1453 = vpop.f32.mrb[0].mxu0
  %v1454 = vadd.f32 %v1310, %v1453
  %v1455 = vpop.f32.mrb[0].mxu0
  %1456 = vdwg.mxu0
  %v1457 = vmax.f32 %v1379, 0.0
  %v1458 = vmax.f32 %v1384, 0.0
  %v1459 = vmax.f32 %v1389, 0.0
  %v1460 = vmax.f32 %v1394, 0.0
  %v1461 = vmax.f32 %v1399, 0.0
  %v1462 = vmax.f32 %v1404, 0.0
  %v1463 = vmax.f32 %v1409, 0.0
  %v1464 = vmax.f32 %v1414, 0.0
  %v1465 = vmax.f32 %v1419, 0.0
  %v1466 = vmax.f32 %v1424, 0.0
  %v1467 = vmax.f32 %v1429, 0.0
  %v1468 = vmax.f32 %v1434, 0.0
  %v1469 = vmax.f32 %v1439, 0.0
  %v1470 = vmax.f32 %v1444, 0.0
  %v1471 = vmax.f32 %v1449, 0.0
  %v1472 = vmax.f32 %v1454, 0.0
  %v1474 = vlaneseq
  %v1475 = vshrl.u32 %v1474, 7
  %v1476 = vsub.s32 0, %v1475
  %v1477 = vrot.slane %v1160, %v1476
  %1479 = vmatprep.subr.mxu0 0.0
  %1480 = vmatpush1.msra.mxu0 %v1144
  %1481 = vmatprep.subr.mxu0 0.0
  %1482 = vmatpush1.msra.mxu0 %v1145
  %1483 = vmatprep.subr.mxu0 0.0
  %1484 = vmatpush1.msra.mxu0 %v1146
  %1485 = vmatprep.subr.mxu0 0.0
  %1486 = vmatpush1.msra.mxu0 %v1147
  %1487 = vmatprep.subr.mxu0 0.0
  %1488 = vmatpush1.msra.mxu0 %v1148
  %1489 = vmatprep.subr.mxu0 0.0
  %1490 = vmatpush1.msra.mxu0 %v1149
  %1491 = vmatprep.subr.mxu0 0.0
  %1492 = vmatpush1.msra.mxu0 %v1150
  %1493 = vmatprep.subr.mxu0 0.0
  %1494 = vmatpush1.msra.mxu0 %v1151
  %1495 = vmatprep.subr.mxu0 0.0
  %1496 = vmatpush1.msra.mxu0 %v1152
  %1497 = vmatprep.subr.mxu0 0.0
  %1498 = vmatpush1.msra.mxu0 %v1153
  %1499 = vmatprep.subr.mxu0 0.0
  %1500 = vmatpush1.msra.mxu0 %v1154
  %1501 = vmatprep.subr.mxu0 0.0
  %1502 = vmatpush1.msra.mxu0 %v1155
  %1503 = vmatprep.subr.mxu0 0.0
  %1504 = vmatpush1.msra.mxu0 %v1156
  %1505 = vmatprep.subr.mxu0 0.0
  %1506 = vmatpush1.msra.mxu0 %v1157
  %1507 = vmatprep.subr.mxu0 0.0
  %1508 = vmatpush1.msra.mxu0 %v1158
  %1509 = vmatprep.subr.mxu0 0.0
  %1510 = vmatpush1.msra.mxu0 %v1159
  %1511 = vmatprep.subr.mxu0 0.0
  %1512 = vmatpush1.msra.mxu0 0.0
  %1513 = vmatprep.subr.mxu0 0.0
  %1514 = vmatpush1.msra.mxu0 0.0
  %1515 = vmatprep.subr.mxu0 0.0
  %1516 = vmatpush1.msra.mxu0 0.0
  %1517 = vmatprep.subr.mxu0 0.0
  %1518 = vmatpush1.msra.mxu0 0.0
  %1519 = vmatprep.subr.mxu0 0.0
  %1520 = vmatpush1.msra.mxu0 0.0
  %1521 = vmatprep.subr.mxu0 0.0
  %1522 = vmatpush1.msra.mxu0 0.0
  %1523 = vmatprep.subr.mxu0 0.0
  %1524 = vmatpush1.msra.mxu0 0.0
  %1525 = vmatprep.subr.mxu0 0.0
  %1526 = vmatpush1.msra.mxu0 0.0
  %1527 = vmatprep.subr.mxu0 0.0
  %1528 = vmatpush1.msra.mxu0 0.0
  %1529 = vmatprep.subr.mxu0 0.0
  %1530 = vmatpush1.msra.mxu0 0.0
  %1531 = vmatprep.subr.mxu0 0.0
  %1532 = vmatpush1.msra.mxu0 0.0
  %1533 = vmatprep.subr.mxu0 0.0
  %1534 = vmatpush1.msra.mxu0 0.0
  %1535 = vmatprep.subr.mxu0 0.0
  %1536 = vmatpush1.msra.mxu0 0.0
  %1537 = vmatprep.subr.mxu0 0.0
  %1538 = vmatpush1.msra.mxu0 0.0
  %1539 = vmatprep.subr.mxu0 0.0
  %1540 = vmatpush1.msra.mxu0 0.0
  %1541 = vmatprep.subr.mxu0 0.0
  %1542 = vmatpush1.msra.mxu0 0.0
  %1543 = vmatprep.mubr.f32.mxu0 0.0
  %1544 = vmatmul.mubr.f32.gmra.mrb[0].mxu0 %v1457
  %v1545 = vpop.f32.mrb[0].mxu0
  %v1546 = vadd.f32 %v1477, %v1545
  %v1547 = vpop.f32.mrb[0].mxu0
  %1548 = vmatprep.mubr.f32.mxu0 0.0
  %1549 = vmatmul.mubr.f32.gmra.mrb[0].mxu0 %v1458
  %v1550 = vpop.f32.mrb[0].mxu0
  %v1551 = vadd.f32 %v1477, %v1550
  %v1552 = vpop.f32.mrb[0].mxu0
  %1553 = vmatprep.mubr.f32.mxu0 0.0
  %1554 = vmatmul.mubr.f32.gmra.mrb[0].mxu0 %v1459
  %v1555 = vpop.f32.mrb[0].mxu0
  %v1556 = vadd.f32 %v1477, %v1555
  %v1557 = vpop.f32.mrb[0].mxu0
  %1558 = vmatprep.mubr.f32.mxu0 0.0
  %1559 = vmatmul.mubr.f32.gmra.mrb[0].mxu0 %v1460
  %v1560 = vpop.f32.mrb[0].mxu0
  %v1561 = vadd.f32 %v1477, %v1560
  %v1562 = vpop.f32.mrb[0].mxu0
  %1563 = vmatprep.mubr.f32.mxu0 0.0
  %1564 = vmatmul.mubr.f32.gmra.mrb[0].mxu0 %v1461
  %v1565 = vpop.f32.mrb[0].mxu0
  %v1566 = vadd.f32 %v1477, %v1565
  %v1567 = vpop.f32.mrb[0].mxu0
  %1568 = vmatprep.mubr.f32.mxu0 0.0
  %1569 = vmatmul.mubr.f32.gmra.mrb[0].mxu0 %v1462
  %v1570 = vpop.f32.mrb[0].mxu0
  %v1571 = vadd.f32 %v1477, %v1570
  %v1572 = vpop.f32.mrb[0].mxu0
  %1573 = vmatprep.mubr.f32.mxu0 0.0
  %1574 = vmatmul.mubr.f32.gmra.mrb[0].mxu0 %v1463
  %v1575 = vpop.f32.mrb[0].mxu0
  %v1576 = vadd.f32 %v1477, %v1575
  %v1577 = vpop.f32.mrb[0].mxu0
  %1578 = vmatprep.mubr.f32.mxu0 0.0
  %1579 = vmatmul.mubr.f32.gmra.mrb[0].mxu0 %v1464
  %v1580 = vpop.f32.mrb[0].mxu0
  %v1581 = vadd.f32 %v1477, %v1580
  %v1582 = vpop.f32.mrb[0].mxu0
  %1583 = vmatprep.mubr.f32.mxu0 0.0
  %1584 = vmatmul.mubr.f32.gmra.mrb[0].mxu0 %v1465
  %v1585 = vpop.f32.mrb[0].mxu0
  %v1586 = vadd.f32 %v1477, %v1585
  %v1587 = vpop.f32.mrb[0].mxu0
  %1588 = vmatprep.mubr.f32.mxu0 0.0
  %1589 = vmatmul.mubr.f32.gmra.mrb[0].mxu0 %v1466
  %v1590 = vpop.f32.mrb[0].mxu0
  %v1591 = vadd.f32 %v1477, %v1590
  %v1592 = vpop.f32.mrb[0].mxu0
  %1593 = vmatprep.mubr.f32.mxu0 0.0
  %1594 = vmatmul.mubr.f32.gmra.mrb[0].mxu0 %v1467
  %v1595 = vpop.f32.mrb[0].mxu0
  %v1596 = vadd.f32 %v1477, %v1595
  %v1597 = vpop.f32.mrb[0].mxu0
  %1598 = vmatprep.mubr.f32.mxu0 0.0
  %1599 = vmatmul.mubr.f32.gmra.mrb[0].mxu0 %v1468
  %v1600 = vpop.f32.mrb[0].mxu0
  %v1601 = vadd.f32 %v1477, %v1600
  %v1602 = vpop.f32.mrb[0].mxu0
  %1603 = vmatprep.mubr.f32.mxu0 0.0
  %1604 = vmatmul.mubr.f32.gmra.mrb[0].mxu0 %v1469
  %v1605 = vpop.f32.mrb[0].mxu0
  %v1606 = vadd.f32 %v1477, %v1605
  %v1607 = vpop.f32.mrb[0].mxu0
  %1608 = vmatprep.mubr.f32.mxu0 0.0
  %1609 = vmatmul.mubr.f32.gmra.mrb[0].mxu0 %v1470
  %v1610 = vpop.f32.mrb[0].mxu0
  %v1611 = vadd.f32 %v1477, %v1610
  %v1612 = vpop.f32.mrb[0].mxu0
  %1613 = vmatprep.mubr.f32.mxu0 0.0
  %1614 = vmatmul.mubr.f32.gmra.mrb[0].mxu0 %v1471
  %v1615 = vpop.f32.mrb[0].mxu0
  %v1616 = vadd.f32 %v1477, %v1615
  %v1617 = vpop.f32.mrb[0].mxu0
  %1618 = vmatprep.mubr.f32.mxu0 0.0
  %1619 = vmatmul.mubr.f32.gmra.mrb[0].mxu0 %v1472
  %v1620 = vpop.f32.mrb[0].mxu0
  %v1621 = vadd.f32 %v1477, %v1620
  %v1622 = vpop.f32.mrb[0].mxu0
  %1623 = vdwg.mxu0
  %v1624 = vmax.f32 %v1546, 0.0
  %v1625 = vmax.f32 %v1551, 0.0
  %v1626 = vmax.f32 %v1556, 0.0
  %v1627 = vmax.f32 %v1561, 0.0
  %v1628 = vmax.f32 %v1566, 0.0
  %v1629 = vmax.f32 %v1571, 0.0
  %v1630 = vmax.f32 %v1576, 0.0
  %v1631 = vmax.f32 %v1581, 0.0
  %v1632 = vmax.f32 %v1586, 0.0
  %v1633 = vmax.f32 %v1591, 0.0
  %v1634 = vmax.f32 %v1596, 0.0
  %v1635 = vmax.f32 %v1601, 0.0
  %v1636 = vmax.f32 %v1606, 0.0
  %v1637 = vmax.f32 %v1611, 0.0
  %v1638 = vmax.f32 %v1616, 0.0
  %v1639 = vmax.f32 %v1621, 0.0
  %1640 = vmatprep.subr.mxu0 0.0
  %1641 = vmatpush1.msra.mxu0 %v598
  %1642 = vmatprep.subr.mxu0 0.0
  %1643 = vmatpush1.msra.mxu0 %v599
  %1644 = vmatprep.subr.mxu0 0.0
  %1645 = vmatpush1.msra.mxu0 %v600
  %1646 = vmatprep.subr.mxu0 0.0
  %1647 = vmatpush1.msra.mxu0 %v601
  %1648 = vmatprep.subr.mxu0 0.0
  %1649 = vmatpush1.msra.mxu0 %v602
  %1650 = vmatprep.subr.mxu0 0.0
  %1651 = vmatpush1.msra.mxu0 %v603
  %1652 = vmatprep.subr.mxu0 0.0
  %1653 = vmatpush1.msra.mxu0 %v604
  %1654 = vmatprep.subr.mxu0 0.0
  %1655 = vmatpush1.msra.mxu0 %v605
  %1656 = vmatprep.subr.mxu0 0.0
  %1657 = vmatpush1.msra.mxu0 %v606
  %1658 = vmatprep.subr.mxu0 0.0
  %1659 = vmatpush1.msra.mxu0 %v607
  %1660 = vmatprep.subr.mxu0 0.0
  %1661 = vmatpush1.msra.mxu0 %v608
  %1662 = vmatprep.subr.mxu0 0.0
  %1663 = vmatpush1.msra.mxu0 %v609
  %1664 = vmatprep.subr.mxu0 0.0
  %1665 = vmatpush1.msra.mxu0 %v610
  %1666 = vmatprep.subr.mxu0 0.0
  %1667 = vmatpush1.msra.mxu0 %v611
  %1668 = vmatprep.subr.mxu0 0.0
  %1669 = vmatpush1.msra.mxu0 %v612
  %1670 = vmatprep.subr.mxu0 0.0
  %1671 = vmatpush1.msra.mxu0 %v613
  %1672 = vmatprep.subr.mxu0 0.0
  %1673 = vmatpush1.msra.mxu0 0.0
  %1674 = vmatprep.subr.mxu0 0.0
  %1675 = vmatpush1.msra.mxu0 0.0
  %1676 = vmatprep.subr.mxu0 0.0
  %1677 = vmatpush1.msra.mxu0 0.0
  %1678 = vmatprep.subr.mxu0 0.0
  %1679 = vmatpush1.msra.mxu0 0.0
  %1680 = vmatprep.subr.mxu0 0.0
  %1681 = vmatpush1.msra.mxu0 0.0
  %1682 = vmatprep.subr.mxu0 0.0
  %1683 = vmatpush1.msra.mxu0 0.0
  %1684 = vmatprep.subr.mxu0 0.0
  %1685 = vmatpush1.msra.mxu0 0.0
  %1686 = vmatprep.subr.mxu0 0.0
  %1687 = vmatpush1.msra.mxu0 0.0
  %1688 = vmatprep.subr.mxu0 0.0
  %1689 = vmatpush1.msra.mxu0 0.0
  %1690 = vmatprep.subr.mxu0 0.0
  %1691 = vmatpush1.msra.mxu0 0.0
  %1692 = vmatprep.subr.mxu0 0.0
  %1693 = vmatpush1.msra.mxu0 0.0
  %1694 = vmatprep.subr.mxu0 0.0
  %1695 = vmatpush1.msra.mxu0 0.0
  %1696 = vmatprep.subr.mxu0 0.0
  %1697 = vmatpush1.msra.mxu0 0.0
  %1698 = vmatprep.subr.mxu0 0.0
  %1699 = vmatpush1.msra.mxu0 0.0
  %1700 = vmatprep.subr.mxu0 0.0
  %1701 = vmatpush1.msra.mxu0 0.0
  %1702 = vmatprep.subr.mxu0 0.0
  %1703 = vmatpush1.msra.mxu0 0.0
  %1704 = vmatprep.mubr.f32.mxu0 0.0
  %1705 = vmatmul.mubr.f32.gmra.mrb[0].mxu0 %v84
  %v1706 = vpop.f32.mrb[0].mxu0
  %v1707 = vadd.f32 0.0, %v1706
  %v1708 = vpop.f32.mrb[0].mxu0
  %1709 = vdwg.mxu0
  %1710 = vmatprep.subr.mxu0 0.0
  %1711 = vmatpush1.msra.mxu0 %v1111
  %1712 = vmatprep.subr.mxu0 0.0
  %1713 = vmatpush1.msra.mxu0 %v1112
  %1714 = vmatprep.subr.mxu0 0.0
  %1715 = vmatpush1.msra.mxu0 %v1113
  %1716 = vmatprep.subr.mxu0 0.0
  %1717 = vmatpush1.msra.mxu0 %v1114
  %1718 = vmatprep.subr.mxu0 0.0
  %1719 = vmatpush1.msra.mxu0 %v1115
  %1720 = vmatprep.subr.mxu0 0.0
  %1721 = vmatpush1.msra.mxu0 %v1116
  %1722 = vmatprep.subr.mxu0 0.0
  %1723 = vmatpush1.msra.mxu0 %v1117
  %1724 = vmatprep.subr.mxu0 0.0
  %1725 = vmatpush1.msra.mxu0 %v1118
  %1726 = vmatprep.subr.mxu0 0.0
  %1727 = vmatpush1.msra.mxu0 %v1119
  %1728 = vmatprep.subr.mxu0 0.0
  %1729 = vmatpush1.msra.mxu0 %v1120
  %1730 = vmatprep.subr.mxu0 0.0
  %1731 = vmatpush1.msra.mxu0 %v1121
  %1732 = vmatprep.subr.mxu0 0.0
  %1733 = vmatpush1.msra.mxu0 %v1122
  %1734 = vmatprep.subr.mxu0 0.0
  %1735 = vmatpush1.msra.mxu0 %v1123
  %1736 = vmatprep.subr.mxu0 0.0
  %1737 = vmatpush1.msra.mxu0 %v1124
  %1738 = vmatprep.subr.mxu0 0.0
  %1739 = vmatpush1.msra.mxu0 %v1125
  %1740 = vmatprep.subr.mxu0 0.0
  %1741 = vmatpush1.msra.mxu0 %v1126
  %1742 = vmatprep.subr.mxu0 0.0
  %1743 = vmatpush1.msra.mxu0 0.0
  %1744 = vmatprep.subr.mxu0 0.0
  %1745 = vmatpush1.msra.mxu0 0.0
  %1746 = vmatprep.subr.mxu0 0.0
  %1747 = vmatpush1.msra.mxu0 0.0
  %1748 = vmatprep.subr.mxu0 0.0
  %1749 = vmatpush1.msra.mxu0 0.0
  %1750 = vmatprep.subr.mxu0 0.0
  %1751 = vmatpush1.msra.mxu0 0.0
  %1752 = vmatprep.subr.mxu0 0.0
  %1753 = vmatpush1.msra.mxu0 0.0
  %1754 = vmatprep.subr.mxu0 0.0
  %1755 = vmatpush1.msra.mxu0 0.0
  %1756 = vmatprep.subr.mxu0 0.0
  %1757 = vmatpush1.msra.mxu0 0.0
  %1758 = vmatprep.subr.mxu0 0.0
  %1759 = vmatpush1.msra.mxu0 0.0
  %1760 = vmatprep.subr.mxu0 0.0
  %1761 = vmatpush1.msra.mxu0 0.0
  %1762 = vmatprep.subr.mxu0 0.0
  %1763 = vmatpush1.msra.mxu0 0.0
  %1764 = vmatprep.subr.mxu0 0.0
  %1765 = vmatpush1.msra.mxu0 0.0
  %1766 = vmatprep.subr.mxu0 0.0
  %1767 = vmatpush1.msra.mxu0 0.0
  %1768 = vmatprep.subr.mxu0 0.0
  %1769 = vmatpush1.msra.mxu0 0.0
  %1770 = vmatprep.subr.mxu0 0.0
  %1771 = vmatpush1.msra.mxu0 0.0
  %1772 = vmatprep.subr.mxu0 0.0
  %1773 = vmatpush1.msra.mxu0 0.0
  %1774 = vmatprep.mubr.f32.mxu0 0.0
  %1775 = vmatmul.mubr.f32.gmra.mrb[0].mxu0 %v84
  %v1776 = vpop.f32.mrb[0].mxu0
  %v1777 = vadd.f32 0.0, %v1776
  %v1778 = vpop.f32.mrb[0].mxu0
  %1779 = vdwg.mxu0
  %1780 = vmatprep.subr.mxu0 0.0
  %1781 = vmatpush1.msra.mxu0 %v1624
  %1782 = vmatprep.subr.mxu0 0.0
  %1783 = vmatpush1.msra.mxu0 %v1625
  %1784 = vmatprep.subr.mxu0 0.0
  %1785 = vmatpush1.msra.mxu0 %v1626
  %1786 = vmatprep.subr.mxu0 0.0
  %1787 = vmatpush1.msra.mxu0 %v1627
  %1788 = vmatprep.subr.mxu0 0.0
  %1789 = vmatpush1.msra.mxu0 %v1628
  %1790 = vmatprep.subr.mxu0 0.0
  %1791 = vmatpush1.msra.mxu0 %v1629
  %1792 = vmatprep.subr.mxu0 0.0
  %1793 = vmatpush1.msra.mxu0 %v1630
  %1794 = vmatprep.subr.mxu0 0.0
  %1795 = vmatpush1.msra.mxu0 %v1631
  %1796 = vmatprep.subr.mxu0 0.0
  %1797 = vmatpush1.msra.mxu0 %v1632
  %1798 = vmatprep.subr.mxu0 0.0
  %1799 = vmatpush1.msra.mxu0 %v1633
  %1800 = vmatprep.subr.mxu0 0.0
  %1801 = vmatpush1.msra.mxu0 %v1634
  %1802 = vmatprep.subr.mxu0 0.0
  %1803 = vmatpush1.msra.mxu0 %v1635
  %1804 = vmatprep.subr.mxu0 0.0
  %1805 = vmatpush1.msra.mxu0 %v1636
  %1806 = vmatprep.subr.mxu0 0.0
  %1807 = vmatpush1.msra.mxu0 %v1637
  %1808 = vmatprep.subr.mxu0 0.0
  %1809 = vmatpush1.msra.mxu0 %v1638
  %1810 = vmatprep.subr.mxu0 0.0
  %1811 = vmatpush1.msra.mxu0 %v1639
  %1812 = vmatprep.subr.mxu0 0.0
  %1813 = vmatpush1.msra.mxu0 0.0
  %1814 = vmatprep.subr.mxu0 0.0
  %1815 = vmatpush1.msra.mxu0 0.0
  %1816 = vmatprep.subr.mxu0 0.0
  %1817 = vmatpush1.msra.mxu0 0.0
  %1818 = vmatprep.subr.mxu0 0.0
  %1819 = vmatpush1.msra.mxu0 0.0
  %1820 = vmatprep.subr.mxu0 0.0
  %1821 = vmatpush1.msra.mxu0 0.0
  %1822 = vmatprep.subr.mxu0 0.0
  %1823 = vmatpush1.msra.mxu0 0.0
  %1824 = vmatprep.subr.mxu0 0.0
  %1825 = vmatpush1.msra.mxu0 0.0
  %1826 = vmatprep.subr.mxu0 0.0
  %1827 = vmatpush1.msra.mxu0 0.0
  %1828 = vmatprep.subr.mxu0 0.0
  %1829 = vmatpush1.msra.mxu0 0.0
  %1830 = vmatprep.subr.mxu0 0.0
  %1831 = vmatpush1.msra.mxu0 0.0
  %1832 = vmatprep.subr.mxu0 0.0
  %1833 = vmatpush1.msra.mxu0 0.0
  %1834 = vmatprep.subr.mxu0 0.0
  %1835 = vmatpush1.msra.mxu0 0.0
  %1836 = vmatprep.subr.mxu0 0.0
  %1837 = vmatpush1.msra.mxu0 0.0
  %1838 = vmatprep.subr.mxu0 0.0
  %1839 = vmatpush1.msra.mxu0 0.0
  %1840 = vmatprep.subr.mxu0 0.0
  %1841 = vmatpush1.msra.mxu0 0.0
  %1842 = vmatprep.subr.mxu0 0.0
  %1843 = vmatpush1.msra.mxu0 0.0
  %1844 = vmatprep.mubr.f32.mxu0 0.0
  %1845 = vmatmul.mubr.f32.gmra.mrb[0].mxu0 %v84
  %v1846 = vpop.f32.mrb[0].mxu0
  %v1847 = vadd.f32 0.0, %v1846
  %v1848 = vpop.f32.mrb[0].mxu0
  %1849 = vdwg.mxu0
  %v1850 = vld [vmem:[%s15] sm:$0xff]
  %v1851 = vld [vmem:[%s15 + $0x8] sm:$0xff]
  %v1852 = vld [vmem:[%s15 + $0x10] sm:$0xff]
  %v1853 = vld [vmem:[%s15 + $0x18] sm:$0xff]
  %v1854 = vld [vmem:[%s15 + $0x20] sm:$0xff]
  %v1855 = vld [vmem:[%s15 + $0x28] sm:$0xff]
  %v1856 = vld [vmem:[%s15 + $0x30] sm:$0xff]
  %v1857 = vld [vmem:[%s15 + $0x38] sm:$0xff]
  %v1858 = vld [vmem:[%s15 + $0x40] sm:$0xff]
  %v1859 = vld [vmem:[%s15 + $0x48] sm:$0xff]
  %v1860 = vld [vmem:[%s15 + $0x50] sm:$0xff]
  %v1861 = vld [vmem:[%s15 + $0x58] sm:$0xff]
  %v1862 = vld [vmem:[%s15 + $0x60] sm:$0xff]
  %v1863 = vld [vmem:[%s15 + $0x68] sm:$0xff]
  %v1864 = vld [vmem:[%s15 + $0x70] sm:$0xff]
  %v1865 = vld [vmem:[%s15 + $0x78] sm:$0xff]
  %v1866 = vld [vmem:[%s16] sm:$0xff]
  %v1867 = vld [vmem:[%s16 + $0x8] sm:$0xff]
  %v1868 = vld [vmem:[%s16 + $0x10] sm:$0xff]
  %v1869 = vld [vmem:[%s16 + $0x18] sm:$0xff]
  %v1870 = vld [vmem:[%s16 + $0x20] sm:$0xff]
  %v1871 = vld [vmem:[%s16 + $0x28] sm:$0xff]
  %v1872 = vld [vmem:[%s16 + $0x30] sm:$0xff]
  %v1873 = vld [vmem:[%s16 + $0x38] sm:$0xff]
  %v1874 = vld [vmem:[%s16 + $0x40] sm:$0xff]
  %v1875 = vld [vmem:[%s16 + $0x48] sm:$0xff]
  %v1876 = vld [vmem:[%s16 + $0x50] sm:$0xff]
  %v1877 = vld [vmem:[%s16 + $0x58] sm:$0xff]
  %v1878 = vld [vmem:[%s16 + $0x60] sm:$0xff]
  %v1879 = vld [vmem:[%s16 + $0x68] sm:$0xff]
  %v1880 = vld [vmem:[%s16 + $0x70] sm:$0xff]
  %v1881 = vld [vmem:[%s16 + $0x78] sm:$0xff]
  %1882 = vmatprep.subr.mxu0 0.0
  %1883 = vmatpush1.msra.mxu0 %v1866
  %1884 = vmatprep.subr.mxu0 0.0
  %1885 = vmatpush1.msra.mxu0 %v1867
  %1886 = vmatprep.subr.mxu0 0.0
  %1887 = vmatpush1.msra.mxu0 %v1868
  %1888 = vmatprep.subr.mxu0 0.0
  %1889 = vmatpush1.msra.mxu0 %v1869
  %1890 = vmatprep.subr.mxu0 0.0
  %1891 = vmatpush1.msra.mxu0 %v1870
  %1892 = vmatprep.subr.mxu0 0.0
  %1893 = vmatpush1.msra.mxu0 %v1871
  %1894 = vmatprep.subr.mxu0 0.0
  %1895 = vmatpush1.msra.mxu0 %v1872
  %1896 = vmatprep.subr.mxu0 0.0
  %1897 = vmatpush1.msra.mxu0 %v1873
  %1898 = vmatprep.subr.mxu0 0.0
  %1899 = vmatpush1.msra.mxu0 %v1874
  %1900 = vmatprep.subr.mxu0 0.0
  %1901 = vmatpush1.msra.mxu0 %v1875
  %1902 = vmatprep.subr.mxu0 0.0
  %1903 = vmatpush1.msra.mxu0 %v1876
  %1904 = vmatprep.subr.mxu0 0.0
  %1905 = vmatpush1.msra.mxu0 %v1877
  %1906 = vmatprep.subr.mxu0 0.0
  %1907 = vmatpush1.msra.mxu0 %v1878
  %1908 = vmatprep.subr.mxu0 0.0
  %1909 = vmatpush1.msra.mxu0 %v1879
  %1910 = vmatprep.subr.mxu0 0.0
  %1911 = vmatpush1.msra.mxu0 %v1880
  %1912 = vmatprep.subr.mxu0 0.0
  %1913 = vmatpush1.msra.mxu0 %v1881
  %1914 = vmatprep.subr.mxu0 0.0
  %1915 = vmatpush1.msra.mxu0 0.0
  %1916 = vmatprep.subr.mxu0 0.0
  %1917 = vmatpush1.msra.mxu0 0.0
  %1918 = vmatprep.subr.mxu0 0.0
  %1919 = vmatpush1.msra.mxu0 0.0
  %1920 = vmatprep.subr.mxu0 0.0
  %1921 = vmatpush1.msra.mxu0 0.0
  %1922 = vmatprep.subr.mxu0 0.0
  %1923 = vmatpush1.msra.mxu0 0.0
  %1924 = vmatprep.subr.mxu0 0.0
  %1925 = vmatpush1.msra.mxu0 0.0
  %1926 = vmatprep.subr.mxu0 0.0
  %1927 = vmatpush1.msra.mxu0 0.0
  %1928 = vmatprep.subr.mxu0 0.0
  %1929 = vmatpush1.msra.mxu0 0.0
  %1930 = vmatprep.subr.mxu0 0.0
  %1931 = vmatpush1.msra.mxu0 0.0
  %1932 = vmatprep.subr.mxu0 0.0
  %1933 = vmatpush1.msra.mxu0 0.0
  %1934 = vmatprep.subr.mxu0 0.0
  %1935 = vmatpush1.msra.mxu0 0.0
  %1936 = vmatprep.subr.mxu0 0.0
  %1937 = vmatpush1.msra.mxu0 0.0
  %1938 = vmatprep.subr.mxu0 0.0
  %1939 = vmatpush1.msra.mxu0 0.0
  %1940 = vmatprep.subr.mxu0 0.0
  %1941 = vmatpush1.msra.mxu0 0.0
  %1942 = vmatprep.subr.mxu0 0.0
  %1943 = vmatpush1.msra.mxu0 0.0
  %1944 = vmatprep.subr.mxu0 0.0
  %1945 = vmatpush1.msra.mxu0 0.0
  %1946 = vmatprep.mubr.f32.mxu0 0.0
  %1947 = vmatmul.mubr.f32.gmra.mrb[0].mxu0 %v1777
  %v1948 = vpop.f32.mrb[0].mxu0
  %v1949 = vadd.f32 0.0, %v1948
  %v1950 = vpop.f32.mrb[0].mxu0
  %1951 = vdwg.mxu0
  %1952 = vmatprep.subr.mxu0 0.0
  %1953 = vmatpush1.msra.mxu0 %v1850
  %1954 = vmatprep.subr.mxu0 0.0
  %1955 = vmatpush1.msra.mxu0 %v1851
  %1956 = vmatprep.subr.mxu0 0.0
  %1957 = vmatpush1.msra.mxu0 %v1852
  %1958 = vmatprep.subr.mxu0 0.0
  %1959 = vmatpush1.msra.mxu0 %v1853
  %1960 = vmatprep.subr.mxu0 0.0
  %1961 = vmatpush1.msra.mxu0 %v1854
  %1962 = vmatprep.subr.mxu0 0.0
  %1963 = vmatpush1.msra.mxu0 %v1855
  %1964 = vmatprep.subr.mxu0 0.0
  %1965 = vmatpush1.msra.mxu0 %v1856
  %1966 = vmatprep.subr.mxu0 0.0
  %1967 = vmatpush1.msra.mxu0 %v1857
  %1968 = vmatprep.subr.mxu0 0.0
  %1969 = vmatpush1.msra.mxu0 %v1858
  %1970 = vmatprep.subr.mxu0 0.0
  %1971 = vmatpush1.msra.mxu0 %v1859
  %1972 = vmatprep.subr.mxu0 0.0
  %1973 = vmatpush1.msra.mxu0 %v1860
  %1974 = vmatprep.subr.mxu0 0.0
  %1975 = vmatpush1.msra.mxu0 %v1861
  %1976 = vmatprep.subr.mxu0 0.0
  %1977 = vmatpush1.msra.mxu0 %v1862
  %1978 = vmatprep.subr.mxu0 0.0
  %1979 = vmatpush1.msra.mxu0 %v1863
  %1980 = vmatprep.subr.mxu0 0.0
  %1981 = vmatpush1.msra.mxu0 %v1864
  %1982 = vmatprep.subr.mxu0 0.0
  %1983 = vmatpush1.msra.mxu0 %v1865
  %1984 = vmatprep.subr.mxu0 0.0
  %1985 = vmatpush1.msra.mxu0 0.0
  %1986 = vmatprep.subr.mxu0 0.0
  %1987 = vmatpush1.msra.mxu0 0.0
  %1988 = vmatprep.subr.mxu0 0.0
  %1989 = vmatpush1.msra.mxu0 0.0
  %1990 = vmatprep.subr.mxu0 0.0
  %1991 = vmatpush1.msra.mxu0 0.0
  %1992 = vmatprep.subr.mxu0 0.0
  %1993 = vmatpush1.msra.mxu0 0.0
  %1994 = vmatprep.subr.mxu0 0.0
  %1995 = vmatpush1.msra.mxu0 0.0
  %1996 = vmatprep.subr.mxu0 0.0
  %1997 = vmatpush1.msra.mxu0 0.0
  %1998 = vmatprep.subr.mxu0 0.0
  %1999 = vmatpush1.msra.mxu0 0.0
  %2000 = vmatprep.subr.mxu0 0.0
  %2001 = vmatpush1.msra.mxu0 0.0
  %2002 = vmatprep.subr.mxu0 0.0
  %2003 = vmatpush1.msra.mxu0 0.0
  %2004 = vmatprep.subr.mxu0 0.0
  %2005 = vmatpush1.msra.mxu0 0.0
  %2006 = vmatprep.subr.mxu0 0.0
  %2007 = vmatpush1.msra.mxu0 0.0
  %2008 = vmatprep.subr.mxu0 0.0
  %2009 = vmatpush1.msra.mxu0 0.0
  %2010 = vmatprep.subr.mxu0 0.0
  %2011 = vmatpush1.msra.mxu0 0.0
  %2012 = vmatprep.subr.mxu0 0.0
  %2013 = vmatpush1.msra.mxu0 0.0
  %2014 = vmatprep.subr.mxu0 0.0
  %2015 = vmatpush1.msra.mxu0 0.0
  %2016 = vmatprep.mubr.f32.mxu0 0.0
  %2017 = vmatmul.mubr.f32.gmra.mrb[0].mxu0 %v1707
  %v2018 = vpop.f32.mrb[0].mxu0
  %v2019 = vadd.f32 %v1949, %v2018
  %v2020 = vpop.f32.mrb[0].mxu0
  %2021 = vdwg.mxu0
  %v2022 = vld [vmem:[%s17] sm:$0xff]
  %v2023 = vld [vmem:[%s17 + $0x8] sm:$0xff]
  %v2024 = vld [vmem:[%s17 + $0x10] sm:$0xff]
  %v2025 = vld [vmem:[%s17 + $0x18] sm:$0xff]
  %v2026 = vld [vmem:[%s17 + $0x20] sm:$0xff]
  %v2027 = vld [vmem:[%s17 + $0x28] sm:$0xff]
  %v2028 = vld [vmem:[%s17 + $0x30] sm:$0xff]
  %v2029 = vld [vmem:[%s17 + $0x38] sm:$0xff]
  %v2030 = vld [vmem:[%s17 + $0x40] sm:$0xff]
  %v2031 = vld [vmem:[%s17 + $0x48] sm:$0xff]
  %v2032 = vld [vmem:[%s17 + $0x50] sm:$0xff]
  %v2033 = vld [vmem:[%s17 + $0x58] sm:$0xff]
  %v2034 = vld [vmem:[%s17 + $0x60] sm:$0xff]
  %v2035 = vld [vmem:[%s17 + $0x68] sm:$0xff]
  %v2036 = vld [vmem:[%s17 + $0x70] sm:$0xff]
  %v2037 = vld [vmem:[%s17 + $0x78] sm:$0xff]
  %2038 = vmatprep.subr.mxu0 0.0
  %2039 = vmatpush1.msra.mxu0 %v2022
  %2040 = vmatprep.subr.mxu0 0.0
  %2041 = vmatpush1.msra.mxu0 %v2023
  %2042 = vmatprep.subr.mxu0 0.0
  %2043 = vmatpush1.msra.mxu0 %v2024
  %2044 = vmatprep.subr.mxu0 0.0
  %2045 = vmatpush1.msra.mxu0 %v2025
  %2046 = vmatprep.subr.mxu0 0.0
  %2047 = vmatpush1.msra.mxu0 %v2026
  %2048 = vmatprep.subr.mxu0 0.0
  %2049 = vmatpush1.msra.mxu0 %v2027
  %2050 = vmatprep.subr.mxu0 0.0
  %2051 = vmatpush1.msra.mxu0 %v2028
  %2052 = vmatprep.subr.mxu0 0.0
  %2053 = vmatpush1.msra.mxu0 %v2029
  %2054 = vmatprep.subr.mxu0 0.0
  %2055 = vmatpush1.msra.mxu0 %v2030
  %2056 = vmatprep.subr.mxu0 0.0
  %2057 = vmatpush1.msra.mxu0 %v2031
  %2058 = vmatprep.subr.mxu0 0.0
  %2059 = vmatpush1.msra.mxu0 %v2032
  %2060 = vmatprep.subr.mxu0 0.0
  %2061 = vmatpush1.msra.mxu0 %v2033
  %2062 = vmatprep.subr.mxu0 0.0
  %2063 = vmatpush1.msra.mxu0 %v2034
  %2064 = vmatprep.subr.mxu0 0.0
  %2065 = vmatpush1.msra.mxu0 %v2035
  %2066 = vmatprep.subr.mxu0 0.0
  %2067 = vmatpush1.msra.mxu0 %v2036
  %2068 = vmatprep.subr.mxu0 0.0
  %2069 = vmatpush1.msra.mxu0 %v2037
  %2070 = vmatprep.subr.mxu0 0.0
  %2071 = vmatpush1.msra.mxu0 0.0
  %2072 = vmatprep.subr.mxu0 0.0
  %2073 = vmatpush1.msra.mxu0 0.0
  %2074 = vmatprep.subr.mxu0 0.0
  %2075 = vmatpush1.msra.mxu0 0.0
  %2076 = vmatprep.subr.mxu0 0.0
  %2077 = vmatpush1.msra.mxu0 0.0
  %2078 = vmatprep.subr.mxu0 0.0
  %2079 = vmatpush1.msra.mxu0 0.0
  %2080 = vmatprep.subr.mxu0 0.0
  %2081 = vmatpush1.msra.mxu0 0.0
  %2082 = vmatprep.subr.mxu0 0.0
  %2083 = vmatpush1.msra.mxu0 0.0
  %2084 = vmatprep.subr.mxu0 0.0
  %2085 = vmatpush1.msra.mxu0 0.0
  %2086 = vmatprep.subr.mxu0 0.0
  %2087 = vmatpush1.msra.mxu0 0.0
  %2088 = vmatprep.subr.mxu0 0.0
  %2089 = vmatpush1.msra.mxu0 0.0
  %2090 = vmatprep.subr.mxu0 0.0
  %2091 = vmatpush1.msra.mxu0 0.0
  %2092 = vmatprep.subr.mxu0 0.0
  %2093 = vmatpush1.msra.mxu0 0.0
  %2094 = vmatprep.subr.mxu0 0.0
  %2095 = vmatpush1.msra.mxu0 0.0
  %2096 = vmatprep.subr.mxu0 0.0
  %2097 = vmatpush1.msra.mxu0 0.0
  %2098 = vmatprep.subr.mxu0 0.0
  %2099 = vmatpush1.msra.mxu0 0.0
  %2100 = vmatprep.subr.mxu0 0.0
  %2101 = vmatpush1.msra.mxu0 0.0
  %2102 = vmatprep.mubr.f32.mxu0 0.0
  %2103 = vmatmul.mubr.f32.gmra.mrb[0].mxu0 %v1847
  %v2104 = vpop.f32.mrb[0].mxu0
  %v2105 = vadd.f32 0.0, %v2104
  %v2106 = vpop.f32.mrb[0].mxu0
  %2107 = vdwg.mxu0
  %v2108 = vadd.f32 %v2019, %v2105
  %v2109 = vld [vmem:[%s18] sm:$0x1]
  %v2111 = vlaneseq
  %v2112 = vshrl.u32 %v2111, 7
  %v2113 = vsub.s32 0, %v2112
  %v2114 = vrot.slane %v2109, %v2113
  %v2116 = vadd.f32 %v2108, %v2114
  %v2117 = vmax.f32 %v2116, 0.0
  %v2118 = vld [vmem:[%s19] sm:$0xff]
  %v2119 = vld [vmem:[%s19 + $0x8] sm:$0xff]
  %v2120 = vld [vmem:[%s19 + $0x10] sm:$0xff]
  %v2121 = vld [vmem:[%s19 + $0x18] sm:$0xff]
  %v2122 = vld [vmem:[%s19 + $0x20] sm:$0xff]
  %v2123 = vld [vmem:[%s19 + $0x28] sm:$0xff]
  %v2124 = vld [vmem:[%s19 + $0x30] sm:$0xff]
  %v2125 = vld [vmem:[%s19 + $0x38] sm:$0xff]
  %v2126 = vld [vmem:[%s19 + $0x40] sm:$0xff]
  %v2127 = vld [vmem:[%s19 + $0x48] sm:$0xff]
  %v2128 = vld [vmem:[%s19 + $0x50] sm:$0xff]
  %v2129 = vld [vmem:[%s19 + $0x58] sm:$0xff]
  %v2130 = vld [vmem:[%s19 + $0x60] sm:$0xff]
  %v2131 = vld [vmem:[%s19 + $0x68] sm:$0xff]
  %v2132 = vld [vmem:[%s19 + $0x70] sm:$0xff]
  %v2133 = vld [vmem:[%s19 + $0x78] sm:$0xff]
  %v2134 = vld [vmem:[%s20] sm:$0x1]
  %v2136 = vlaneseq
  %v2137 = vshrl.u32 %v2136, 7
  %v2138 = vsub.s32 0, %v2137
  %v2139 = vrot.slane %v2134, %v2138
  %2141 = vmatprep.subr.mxu0 0.0
  %2142 = vmatpush1.msra.mxu0 %v2118
  %2143 = vmatprep.subr.mxu0 0.0
  %2144 = vmatpush1.msra.mxu0 %v2119
  %2145 = vmatprep.subr.mxu0 0.0
  %2146 = vmatpush1.msra.mxu0 %v2120
  %2147 = vmatprep.subr.mxu0 0.0
  %2148 = vmatpush1.msra.mxu0 %v2121
  %2149 = vmatprep.subr.mxu0 0.0
  %2150 = vmatpush1.msra.mxu0 %v2122
  %2151 = vmatprep.subr.mxu0 0.0
  %2152 = vmatpush1.msra.mxu0 %v2123
  %2153 = vmatprep.subr.mxu0 0.0
  %2154 = vmatpush1.msra.mxu0 %v2124
  %2155 = vmatprep.subr.mxu0 0.0
  %2156 = vmatpush1.msra.mxu0 %v2125
  %2157 = vmatprep.subr.mxu0 0.0
  %2158 = vmatpush1.msra.mxu0 %v2126
  %2159 = vmatprep.subr.mxu0 0.0
  %2160 = vmatpush1.msra.mxu0 %v2127
  %2161 = vmatprep.subr.mxu0 0.0
  %2162 = vmatpush1.msra.mxu0 %v2128
  %2163 = vmatprep.subr.mxu0 0.0
  %2164 = vmatpush1.msra.mxu0 %v2129
  %2165 = vmatprep.subr.mxu0 0.0
  %2166 = vmatpush1.msra.mxu0 %v2130
  %2167 = vmatprep.subr.mxu0 0.0
  %2168 = vmatpush1.msra.mxu0 %v2131
  %2169 = vmatprep.subr.mxu0 0.0
  %2170 = vmatpush1.msra.mxu0 %v2132
  %2171 = vmatprep.subr.mxu0 0.0
  %2172 = vmatpush1.msra.mxu0 %v2133
  %2173 = vmatprep.subr.mxu0 0.0
  %2174 = vmatpush1.msra.mxu0 0.0
  %2175 = vmatprep.subr.mxu0 0.0
  %2176 = vmatpush1.msra.mxu0 0.0
  %2177 = vmatprep.subr.mxu0 0.0
  %2178 = vmatpush1.msra.mxu0 0.0
  %2179 = vmatprep.subr.mxu0 0.0
  %2180 = vmatpush1.msra.mxu0 0.0
  %2181 = vmatprep.subr.mxu0 0.0
  %2182 = vmatpush1.msra.mxu0 0.0
  %2183 = vmatprep.subr.mxu0 0.0
  %2184 = vmatpush1.msra.mxu0 0.0
  %2185 = vmatprep.subr.mxu0 0.0
  %2186 = vmatpush1.msra.mxu0 0.0
  %2187 = vmatprep.subr.mxu0 0.0
  %2188 = vmatpush1.msra.mxu0 0.0
  %2189 = vmatprep.subr.mxu0 0.0
  %2190 = vmatpush1.msra.mxu0 0.0
  %2191 = vmatprep.subr.mxu0 0.0
  %2192 = vmatpush1.msra.mxu0 0.0
  %2193 = vmatprep.subr.mxu0 0.0
  %2194 = vmatpush1.msra.mxu0 0.0
  %2195 = vmatprep.subr.mxu0 0.0
  %2196 = vmatpush1.msra.mxu0 0.0
  %2197 = vmatprep.subr.mxu0 0.0
  %2198 = vmatpush1.msra.mxu0 0.0
  %2199 = vmatprep.subr.mxu0 0.0
  %2200 = vmatpush1.msra.mxu0 0.0
  %2201 = vmatprep.subr.mxu0 0.0
  %2202 = vmatpush1.msra.mxu0 0.0
  %2203 = vmatprep.subr.mxu0 0.0
  %2204 = vmatpush1.msra.mxu0 0.0
  %2205 = vmatprep.mubr.f32.mxu0 0.0
  %2206 = vmatmul.mubr.f32.gmra.mrb[0].mxu0 %v2117
  %v2207 = vpop.f32.mrb[0].mxu0
  %v2208 = vadd.f32 %v2139, %v2207
  %v2209 = vpop.f32.mrb[0].mxu0
  %2210 = vdwg.mxu0
  %2211 = vst [vmem:[%s21] sm:$0xff] %v2208
  // Predicated region
  $region86: #{gin_forward_impl.1} parent=0 // pred_check
    _
  $region87: #{gin_forward_impl.1} parent=0 // pred_check_branch
    %2213 = sbr.rel (0) target = $region89
  $region88: #{gin_forward_impl.1} parent=0 // pred_region
    _
  $region89: #{gin_forward_impl.1} parent=0 // pred_fallthru
    _
  // Predicated region
  $region90: #{gin_forward_impl.1} parent=0 // pred_check
    _
  $region91: #{gin_forward_impl.1} parent=0 // pred_check_branch
    %2215 = sbr.rel (0) target = $region93
  $region92: #{gin_forward_impl.1} parent=0 // pred_region
    _
  $region93: #{gin_forward_impl.1} parent=0 // pred_fallthru
    _

</llo_original>
